<compile_context>
chip_gen: v5e
topology: v5e:2x2
jax: 0.10.0
libtpu: 0.0.40
codegen_flags: <defaults>
</compile_context>

<pallas_src>
import math

import jax
import jax.numpy as jnp
from jax import lax
from jax.experimental import pallas as pl
from jax.experimental.pallas import tpu as pltpu


# ---------------- standalone 2x2 average pool (only used for stride == 2) ----------------

def _avgpool2x2_kernel(x_ref, o_ref):
    # x_ref: (H, W, C)   o_ref: (H//2, W//2, C)
    ho, wo, _ = o_ref.shape
    s = (x_ref[pl.ds(0, ho, stride=2), pl.ds(0, wo, stride=2), :]
         + x_ref[pl.ds(0, ho, stride=2), pl.ds(1, wo, stride=2), :]
         + x_ref[pl.ds(1, ho, stride=2), pl.ds(0, wo, stride=2), :]
         + x_ref[pl.ds(1, ho, stride=2), pl.ds(1, wo, stride=2), :])
    o_ref[...] = (s * 0.25).astype(o_ref.dtype)


def avgpool2x2_nhwc(x):
    n, h, w, c = x.shape
    ho, wo = h // 2, w // 2
    return pl.pallas_call(
        _avgpool2x2_kernel,
        out_shape=jax.ShapeDtypeStruct((n, ho, wo, c), x.dtype),
        grid_spec=pltpu.PrefetchScalarGridSpec(
            num_scalar_prefetch=0,
            grid=(n,),
            in_specs=[pl.BlockSpec((None, h, w, c), lambda i: (i, 0, 0, 0))],
            out_specs=pl.BlockSpec((None, ho, wo, c), lambda i: (i, 0, 0, 0)),
        ),
        compiler_params=pltpu.CompilerParams(dimension_semantics=("parallel",)),
    )(x)


# ---------------- fused FirstOctaveConv kernel ----------------
# Per grid step (one image):
#   x_ref   : (H, W, Cin)      NHWC activation tile (read once from HBM)
#   w_h_ref : (9*Cin, Cout_h)  packed h2h weights ((kh,kw,ci) rows)
#   w_l_ref : (9*Cin, Cout_l)  packed h2l weights, pre-scaled by 0.25
#   o_h_ref : (H*W, Cout_h)    high-frequency output slab
#   o_l_ref : (H/2*W/2, Cout_l) low-frequency output slab
#   pad_h   : (H+2, W+2, Cin)  VMEM scratch, zero-padded x
#   pad_l   : (H/2+2, W/2+2, Cin) VMEM scratch, zero-padded pooled x

def _fused_first_octave_kernel(x_ref, w_h_ref, w_l_ref, o_h_ref, o_l_ref,
                               pad_h_ref, pad_l_ref):
    h, w, c = x_ref.shape
    ho, wo = h // 2, w // 2

    # -- in-kernel "same" padding (VMEM scratch; no HBM pad pass) --
    pad_h_ref[...] = jnp.zeros_like(pad_h_ref)
    pad_l_ref[...] = jnp.zeros_like(pad_l_ref)
    pad_h_ref[pl.ds(1, h), pl.ds(1, w), :] = x_ref[...]

    # -- fused 2x2/stride-2 average pool; the 0.25 scale is folded into w_l --
    pooled = (x_ref[pl.ds(0, ho, stride=2), pl.ds(0, wo, stride=2), :]
              + x_ref[pl.ds(0, ho, stride=2), pl.ds(1, wo, stride=2), :]
              + x_ref[pl.ds(1, ho, stride=2), pl.ds(0, wo, stride=2), :]
              + x_ref[pl.ds(1, ho, stride=2), pl.ds(1, wo, stride=2), :])
    pad_l_ref[pl.ds(1, ho), pl.ds(1, wo), :] = pooled

    def conv3x3(pad_ref, w_ref, hh, ww):
        # im2col: gather the 9 shifted taps into one (hh*ww, 9*Cin) matrix so the
        # MXU runs a single fat contraction instead of 9 thin K=Cin matmuls.
        taps = []
        for kh in range(3):
            for kw in range(3):
                xs = pad_ref[pl.ds(kh, hh), pl.ds(kw, ww), :]       # (hh, ww, Cin)
                taps.append(xs.reshape(hh * ww, c))                 # sublane merge
        cols = jnp.concatenate(taps, axis=-1)                       # (hh*ww, 9*Cin)
        return jnp.dot(cols, w_ref[...], preferred_element_type=jnp.float32)

    o_h_ref[...] = conv3x3(pad_h_ref, w_h_ref, h, w).astype(o_h_ref.dtype)
    o_l_ref[...] = conv3x3(pad_l_ref, w_l_ref, ho, wo).astype(o_l_ref.dtype)


def _pack_weight(w_oihw, scale=1.0):
    # (O, I, 3, 3) -> (9*I, O), row index = (kh*3 + kw)*I + i  (matches im2col order)
    o, i, kh, kw = w_oihw.shape
    w = jnp.transpose(w_oihw, (2, 3, 1, 0)).reshape(kh * kw * i, o)
    return (w * scale).astype(jnp.float32)


def first_octave_conv(x_nchw, w_h2h_oihw, w_h2l_oihw, stride=1):
    """Returns (X_h, X_l) in NCHW, matching the PyTorch FirstOctaveConv module."""
    assert stride in (1, 2), "only stride 1 or 2 is supported"

    # TODO(synk): accept/return NHWC at the API boundary to drop this transpose pass.
    x_nhwc = jnp.transpose(x_nchw, (0, 2, 3, 1))
    if stride == 2:
        x_nhwc = avgpool2x2_nhwc(x_nhwc)

    n, h, w, c = x_nhwc.shape
    assert h % 2 == 0 and w % 2 == 0, "avg-pool branch requires even spatial dims"
    ho, wo = h // 2, w // 2
    c_h = w_h2h_oihw.shape[0]
    c_l = w_h2l_oihw.shape[0]

    w_h = _pack_weight(w_h2h_oihw)                  # (9*Cin, Cout_h)
    w_l = _pack_weight(w_h2l_oihw, scale=0.25)      # pool scale folded into weights

    flops = 2 * n * 9 * c * (h * w * c_h + ho * wo * c_l) + 3 * n * h * w * c
    bytes_accessed = 4 * (n * h * w * c + n * h * w * c_h + n * ho * wo * c_l
                          + 9 * c * (c_h + c_l))

    out_h, out_l = pl.pallas_call(
        _fused_first_octave_kernel,
        out_shape=(jax.ShapeDtypeStruct((n, h * w, c_h), x_nhwc.dtype),
                   jax.ShapeDtypeStruct((n, ho * wo, c_l), x_nhwc.dtype)),
        grid_spec=pltpu.PrefetchScalarGridSpec(
            num_scalar_prefetch=0,
            grid=(n,),
            in_specs=[
                pl.BlockSpec((None, h, w, c), lambda i: (i, 0, 0, 0)),
                pl.BlockSpec((9 * c, c_h), lambda i: (0, 0)),
                pl.BlockSpec((9 * c, c_l), lambda i: (0, 0)),
            ],
            out_specs=[
                pl.BlockSpec((None, h * w, c_h), lambda i: (i, 0, 0)),
                pl.BlockSpec((None, ho * wo, c_l), lambda i: (i, 0, 0)),
            ],
            scratch_shapes=[
                pltpu.VMEM((h + 2, w + 2, c), jnp.float32),
                pltpu.VMEM((ho + 2, wo + 2, c), jnp.float32),
            ],
        ),
        compiler_params=pltpu.CompilerParams(
            dimension_semantics=("parallel",),
            vmem_limit_bytes=32 * 1024 * 1024,
        ),
        cost_estimate=pl.CostEstimate(flops=flops, transcendentals=0,
                                      bytes_accessed=bytes_accessed),
    )(x_nhwc, w_h, w_l)

    # (N, H*W, Cout) -> NCHW.  The reshape is free; only the small output transposes remain.
    x_h = jnp.transpose(out_h.reshape(n, h, w, c_h), (0, 3, 1, 2))
    x_l = jnp.transpose(out_l.reshape(n, ho, wo, c_l), (0, 3, 1, 2))
    return x_h, x_l


# ---------------- pure-JAX reference for verification ----------------

def _ref_forward(x, w_h2h, w_h2l):
    def pool(v):
        return lax.reduce_window(v, 0.0, lax.add, (1, 1, 2, 2), (1, 1, 2, 2), "VALID") * 0.25

    def conv(v, w):
        return lax.conv_general_dilated(v, w, (1, 1), ((1, 1), (1, 1)),
                                        dimension_numbers=("NCHW", "OIHW", "NCHW"))

    return conv(x, w_h2h), conv(pool(x), w_h2l)


if __name__ == "__main__":
    key = jax.random.PRNGKey(0)
    k_x, k_h2h, k_h2l = jax.random.split(key, 3)

    # Module config: in_channels=4, kernel_size=(3,3), alpha=0.5, stride=1, padding=1, bias=False
    N, C, H, W = 2, 4, 16, 16
    alpha = 0.5
    c_low = int(alpha * C)     # h2l out channels = 2
    c_high = C - c_low         # h2h out channels = 2

    x = jax.random.normal(k_x, (N, C, H, W), jnp.float32)
    bound = 1.0 / math.sqrt(C * 3 * 3)
    w_h2h = jax.random.uniform(k_h2h, (c_high, C, 3, 3), jnp.float32, -bound, bound)
    w_h2l = jax.random.uniform(k_h2l, (c_low, C, 3, 3), jnp.float32, -bound, bound)

    x_h, x_l = first_octave_conv(x, w_h2h, w_h2l)
    (x_h, x_l) = jax.block_until_ready((x_h, x_l))

    ref_h, ref_l = _ref_forward(x, w_h2h, w_h2l)
    assert x_h.shape == (N, c_high, H, W), x_h.shape
    assert x_l.shape == (N, c_low, H // 2, W // 2), x_l.shape
    assert jnp.allclose(x_h, ref_h, atol=1e-4, rtol=1e-4)
    assert jnp.allclose(x_l, ref_l, atol=1e-4, rtol=1e-4)

    print("KERNEL_OK")
</pallas_src>

<mosaic_0001>
module attributes {stable_mosaic.version = 11 : i64} {
  func.func @_fused_first_octave_kernel(%arg0: i32, %arg1: memref<1x16x16x4xf32, #tpu.memory_space<vmem>>, %arg2: memref<36x2xf32, #tpu.memory_space<vmem>>, %arg3: memref<36x2xf32, #tpu.memory_space<vmem>>, %arg4: memref<1x256x2xf32, #tpu.memory_space<vmem>>, %arg5: memref<1x64x2xf32, #tpu.memory_space<vmem>>, %arg6: memref<18x18x4xf32, #tpu.memory_space<vmem>>, %arg7: memref<10x10x4xf32, #tpu.memory_space<vmem>>) attributes {dimension_semantics = [#tpu.dimension_semantics<parallel>], iteration_bounds = array<i64: 2>, scalar_prefetch = 0 : i64, scratch_operands = 2 : i64, tpu.core_type = #tpu.core_type<tc>, window_params = [{transform_indices = @transform_0, window_bounds = array<i64: 1, 16, 16, 4>}, {pipeline_mode = #tpu.pipeline_mode<synchronous>, transform_indices = @transform_1, window_bounds = array<i64: 36, 2>}, {pipeline_mode = #tpu.pipeline_mode<synchronous>, transform_indices = @transform_2, window_bounds = array<i64: 36, 2>}, {transform_indices = @transform_3, window_bounds = array<i64: 1, 256, 2>}, {transform_indices = @transform_4, window_bounds = array<i64: 1, 64, 2>}]} {
    %cst = arith.constant 0.000000e+00 : f32
    %0 = vector.broadcast %cst : f32 to vector<18x18x4xf32>
    %c0 = arith.constant 0 : index
    %c0_0 = arith.constant 0 : index
    %c0_1 = arith.constant 0 : index
    %1 = vector.load %arg6[%c0, %c0_0, %c0_1] : memref<18x18x4xf32, #tpu.memory_space<vmem>>, vector<18x18x4xf32>
    tpu.vector_store %arg6[%c0, %c0_0, %c0_1], %0 {strides = array<i32>} : memref<18x18x4xf32, #tpu.memory_space<vmem>>, vector<18x18x4xf32>,
    %cst_2 = arith.constant 0.000000e+00 : f32
    %2 = vector.broadcast %cst_2 : f32 to vector<10x10x4xf32>
    %c0_3 = arith.constant 0 : index
    %c0_4 = arith.constant 0 : index
    %c0_5 = arith.constant 0 : index
    %3 = vector.load %arg7[%c0_3, %c0_4, %c0_5] : memref<10x10x4xf32, #tpu.memory_space<vmem>>, vector<10x10x4xf32>
    tpu.vector_store %arg7[%c0_3, %c0_4, %c0_5], %2 {strides = array<i32>} : memref<10x10x4xf32, #tpu.memory_space<vmem>>, vector<10x10x4xf32>,
    %c0_6 = arith.constant 0 : index
    %c0_7 = arith.constant 0 : index
    %c0_8 = arith.constant 0 : index
    %c0_9 = arith.constant 0 : index
    %4 = vector.load %arg1[%c0_6, %c0_7, %c0_8, %c0_9] : memref<1x16x16x4xf32, #tpu.memory_space<vmem>>, vector<1x16x16x4xf32>
    %5 = vector.shape_cast %4 : vector<1x16x16x4xf32> to vector<16x16x4xf32>
    %c1 = arith.constant 1 : index
    %c1_10 = arith.constant 1 : index
    %c0_11 = arith.constant 0 : index
    %6 = vector.load %arg6[%c1, %c1_10, %c0_11] : memref<18x18x4xf32, #tpu.memory_space<vmem>>, vector<16x16x4xf32>
    tpu.vector_store %arg6[%c1, %c1_10, %c0_11], %5 {strides = array<i32>} : memref<18x18x4xf32, #tpu.memory_space<vmem>>, vector<16x16x4xf32>,
    %c0_12 = arith.constant 0 : index
    %c0_13 = arith.constant 0 : index
    %c0_14 = arith.constant 0 : index
    %c0_15 = arith.constant 0 : index
    %7 = tpu.strided_load %arg1[%c0_12, %c0_13, %c0_14, %c0_15] {strides = array<i32: 1, 2, 2, 1>} : memref<1x16x16x4xf32, #tpu.memory_space<vmem>>, vector<1x8x8x4xf32>
    %8 = vector.shape_cast %7 : vector<1x8x8x4xf32> to vector<8x8x4xf32>
    %c0_16 = arith.constant 0 : index
    %c0_17 = arith.constant 0 : index
    %c1_18 = arith.constant 1 : index
    %c0_19 = arith.constant 0 : index
    %9 = tpu.strided_load %arg1[%c0_16, %c0_17, %c1_18, %c0_19] {strides = array<i32: 1, 2, 2, 1>} : memref<1x16x16x4xf32, #tpu.memory_space<vmem>>, vector<1x8x8x4xf32>
    %10 = vector.shape_cast %9 : vector<1x8x8x4xf32> to vector<8x8x4xf32>
    %11 = arith.addf %8, %10 : vector<8x8x4xf32>
    %c0_20 = arith.constant 0 : index
    %c1_21 = arith.constant 1 : index
    %c0_22 = arith.constant 0 : index
    %c0_23 = arith.constant 0 : index
    %12 = tpu.strided_load %arg1[%c0_20, %c1_21, %c0_22, %c0_23] {strides = array<i32: 1, 2, 2, 1>} : memref<1x16x16x4xf32, #tpu.memory_space<vmem>>, vector<1x8x8x4xf32>
    %13 = vector.shape_cast %12 : vector<1x8x8x4xf32> to vector<8x8x4xf32>
    %14 = arith.addf %11, %13 : vector<8x8x4xf32>
    %c0_24 = arith.constant 0 : index
    %c1_25 = arith.constant 1 : index
    %c1_26 = arith.constant 1 : index
    %c0_27 = arith.constant 0 : index
    %15 = tpu.strided_load %arg1[%c0_24, %c1_25, %c1_26, %c0_27] {strides = array<i32: 1, 2, 2, 1>} : memref<1x16x16x4xf32, #tpu.memory_space<vmem>>, vector<1x8x8x4xf32>
    %16 = vector.shape_cast %15 : vector<1x8x8x4xf32> to vector<8x8x4xf32>
    %17 = arith.addf %14, %16 : vector<8x8x4xf32>
    %c1_28 = arith.constant 1 : index
    %c1_29 = arith.constant 1 : index
    %c0_30 = arith.constant 0 : index
    %18 = vector.load %arg7[%c1_28, %c1_29, %c0_30] : memref<10x10x4xf32, #tpu.memory_space<vmem>>, vector<8x8x4xf32>
    tpu.vector_store %arg7[%c1_28, %c1_29, %c0_30], %17 {strides = array<i32>} : memref<10x10x4xf32, #tpu.memory_space<vmem>>, vector<8x8x4xf32>,
    %c0_31 = arith.constant 0 : index
    %c0_32 = arith.constant 0 : index
    %c0_33 = arith.constant 0 : index
    %19 = vector.load %arg6[%c0_31, %c0_32, %c0_33] : memref<18x18x4xf32, #tpu.memory_space<vmem>>, vector<16x16x4xf32>
    %20 = vector.shape_cast %19 : vector<16x16x4xf32> to vector<256x4xf32>
    %c0_34 = arith.constant 0 : index
    %c1_35 = arith.constant 1 : index
    %c0_36 = arith.constant 0 : index
    %21 = vector.load %arg6[%c0_34, %c1_35, %c0_36] : memref<18x18x4xf32, #tpu.memory_space<vmem>>, vector<16x16x4xf32>
    %22 = vector.shape_cast %21 : vector<16x16x4xf32> to vector<256x4xf32>
    %c0_37 = arith.constant 0 : index
    %c2 = arith.constant 2 : index
    %c0_38 = arith.constant 0 : index
    %23 = vector.load %arg6[%c0_37, %c2, %c0_38] : memref<18x18x4xf32, #tpu.memory_space<vmem>>, vector<16x16x4xf32>
    %24 = vector.shape_cast %23 : vector<16x16x4xf32> to vector<256x4xf32>
    %c1_39 = arith.constant 1 : index
    %c0_40 = arith.constant 0 : index
    %c0_41 = arith.constant 0 : index
    %25 = vector.load %arg6[%c1_39, %c0_40, %c0_41] : memref<18x18x4xf32, #tpu.memory_space<vmem>>, vector<16x16x4xf32>
    %26 = vector.shape_cast %25 : vector<16x16x4xf32> to vector<256x4xf32>
    %c1_42 = arith.constant 1 : index
    %c1_43 = arith.constant 1 : index
    %c0_44 = arith.constant 0 : index
    %27 = vector.load %arg6[%c1_42, %c1_43, %c0_44] : memref<18x18x4xf32, #tpu.memory_space<vmem>>, vector<16x16x4xf32>
    %28 = vector.shape_cast %27 : vector<16x16x4xf32> to vector<256x4xf32>
    %c1_45 = arith.constant 1 : index
    %c2_46 = arith.constant 2 : index
    %c0_47 = arith.constant 0 : index
    %29 = vector.load %arg6[%c1_45, %c2_46, %c0_47] : memref<18x18x4xf32, #tpu.memory_space<vmem>>, vector<16x16x4xf32>
    %30 = vector.shape_cast %29 : vector<16x16x4xf32> to vector<256x4xf32>
    %c2_48 = arith.constant 2 : index
    %c0_49 = arith.constant 0 : index
    %c0_50 = arith.constant 0 : index
    %31 = vector.load %arg6[%c2_48, %c0_49, %c0_50] : memref<18x18x4xf32, #tpu.memory_space<vmem>>, vector<16x16x4xf32>
    %32 = vector.shape_cast %31 : vector<16x16x4xf32> to vector<256x4xf32>
    %c2_51 = arith.constant 2 : index
    %c1_52 = arith.constant 1 : index
    %c0_53 = arith.constant 0 : index
    %33 = vector.load %arg6[%c2_51, %c1_52, %c0_53] : memref<18x18x4xf32, #tpu.memory_space<vmem>>, vector<16x16x4xf32>
    %34 = vector.shape_cast %33 : vector<16x16x4xf32> to vector<256x4xf32>
    %c2_54 = arith.constant 2 : index
    %c2_55 = arith.constant 2 : index
    %c0_56 = arith.constant 0 : index
    %35 = vector.load %arg6[%c2_54, %c2_55, %c0_56] : memref<18x18x4xf32, #tpu.memory_space<vmem>>, vector<16x16x4xf32>
    %36 = vector.shape_cast %35 : vector<16x16x4xf32> to vector<256x4xf32>
    %37 = tpu.concatenate %20, %22, %24, %26, %28, %30, %32, %34, %36 in 1 : vector<256x4xf32>, vector<256x4xf32>, vector<256x4xf32>, vector<256x4xf32>, vector<256x4xf32>, vector<256x4xf32>, vector<256x4xf32>, vector<256x4xf32>, vector<256x4xf32> -> vector<256x36xf32>
    %c0_57 = arith.constant 0 : index
    %c0_58 = arith.constant 0 : index
    %38 = vector.load %arg2[%c0_57, %c0_58] : memref<36x2xf32, #tpu.memory_space<vmem>>, vector<36x2xf32>
    %cst_59 = arith.constant dense<0.000000e+00> : vector<256x2xf32>
    %39 = tpu.matmul %37, %38, %cst_59 {dimension_numbers = #tpu.dot_dimension_numbers<[1], [0], [0], [1], [0, 0, 1, 1], [], []>} : vector<256x36xf32>, vector<36x2xf32>, vector<256x2xf32> -> vector<256x2xf32>
    %c0_60 = arith.constant 0 : index
    %c0_61 = arith.constant 0 : index
    %c0_62 = arith.constant 0 : index
    %40 = vector.load %arg4[%c0_60, %c0_61, %c0_62] : memref<1x256x2xf32, #tpu.memory_space<vmem>>, vector<1x256x2xf32>
    %41 = vector.shape_cast %40 : vector<1x256x2xf32> to vector<256x2xf32>
    %42 = vector.shape_cast %39 : vector<256x2xf32> to vector<1x256x2xf32>
    tpu.vector_store %arg4[%c0_60, %c0_61, %c0_62], %42 {strides = array<i32>} : memref<1x256x2xf32, #tpu.memory_space<vmem>>, vector<1x256x2xf32>,
    %c0_63 = arith.constant 0 : index
    %c0_64 = arith.constant 0 : index
    %c0_65 = arith.constant 0 : index
    %43 = vector.load %arg7[%c0_63, %c0_64, %c0_65] : memref<10x10x4xf32, #tpu.memory_space<vmem>>, vector<8x8x4xf32>
    %44 = vector.shape_cast %43 : vector<8x8x4xf32> to vector<64x4xf32>
    %c0_66 = arith.constant 0 : index
    %c1_67 = arith.constant 1 : index
    %c0_68 = arith.constant 0 : index
    %45 = vector.load %arg7[%c0_66, %c1_67, %c0_68] : memref<10x10x4xf32, #tpu.memory_space<vmem>>, vector<8x8x4xf32>
    %46 = vector.shape_cast %45 : vector<8x8x4xf32> to vector<64x4xf32>
    %c0_69 = arith.constant 0 : index
    %c2_70 = arith.constant 2 : index
    %c0_71 = arith.constant 0 : index
    %47 = vector.load %arg7[%c0_69, %c2_70, %c0_71] : memref<10x10x4xf32, #tpu.memory_space<vmem>>, vector<8x8x4xf32>
    %48 = vector.shape_cast %47 : vector<8x8x4xf32> to vector<64x4xf32>
    %c1_72 = arith.constant 1 : index
    %c0_73 = arith.constant 0 : index
    %c0_74 = arith.constant 0 : index
    %49 = vector.load %arg7[%c1_72, %c0_73, %c0_74] : memref<10x10x4xf32, #tpu.memory_space<vmem>>, vector<8x8x4xf32>
    %50 = vector.shape_cast %49 : vector<8x8x4xf32> to vector<64x4xf32>
    %c1_75 = arith.constant 1 : index
    %c1_76 = arith.constant 1 : index
    %c0_77 = arith.constant 0 : index
    %51 = vector.load %arg7[%c1_75, %c1_76, %c0_77] : memref<10x10x4xf32, #tpu.memory_space<vmem>>, vector<8x8x4xf32>
    %52 = vector.shape_cast %51 : vector<8x8x4xf32> to vector<64x4xf32>
    %c1_78 = arith.constant 1 : index
    %c2_79 = arith.constant 2 : index
    %c0_80 = arith.constant 0 : index
    %53 = vector.load %arg7[%c1_78, %c2_79, %c0_80] : memref<10x10x4xf32, #tpu.memory_space<vmem>>, vector<8x8x4xf32>
    %54 = vector.shape_cast %53 : vector<8x8x4xf32> to vector<64x4xf32>
    %c2_81 = arith.constant 2 : index
    %c0_82 = arith.constant 0 : index
    %c0_83 = arith.constant 0 : index
    %55 = vector.load %arg7[%c2_81, %c0_82, %c0_83] : memref<10x10x4xf32, #tpu.memory_space<vmem>>, vector<8x8x4xf32>
    %56 = vector.shape_cast %55 : vector<8x8x4xf32> to vector<64x4xf32>
    %c2_84 = arith.constant 2 : index
    %c1_85 = arith.constant 1 : index
    %c0_86 = arith.constant 0 : index
    %57 = vector.load %arg7[%c2_84, %c1_85, %c0_86] : memref<10x10x4xf32, #tpu.memory_space<vmem>>, vector<8x8x4xf32>
    %58 = vector.shape_cast %57 : vector<8x8x4xf32> to vector<64x4xf32>
    %c2_87 = arith.constant 2 : index
    %c2_88 = arith.constant 2 : index
    %c0_89 = arith.constant 0 : index
    %59 = vector.load %arg7[%c2_87, %c2_88, %c0_89] : memref<10x10x4xf32, #tpu.memory_space<vmem>>, vector<8x8x4xf32>
    %60 = vector.shape_cast %59 : vector<8x8x4xf32> to vector<64x4xf32>
    %61 = tpu.concatenate %44, %46, %48, %50, %52, %54, %56, %58, %60 in 1 : vector<64x4xf32>, vector<64x4xf32>, vector<64x4xf32>, vector<64x4xf32>, vector<64x4xf32>, vector<64x4xf32>, vector<64x4xf32>, vector<64x4xf32>, vector<64x4xf32> -> vector<64x36xf32>
    %c0_90 = arith.constant 0 : index
    %c0_91 = arith.constant 0 : index
    %62 = vector.load %arg3[%c0_90, %c0_91] : memref<36x2xf32, #tpu.memory_space<vmem>>, vector<36x2xf32>
    %cst_92 = arith.constant dense<0.000000e+00> : vector<64x2xf32>
    %63 = tpu.matmul %61, %62, %cst_92 {dimension_numbers = #tpu.dot_dimension_numbers<[1], [0], [0], [1], [0, 0, 1, 1], [], []>} : vector<64x36xf32>, vector<36x2xf32>, vector<64x2xf32> -> vector<64x2xf32>
    %c0_93 = arith.constant 0 : index
    %c0_94 = arith.constant 0 : index
    %c0_95 = arith.constant 0 : index
    %64 = vector.load %arg5[%c0_93, %c0_94, %c0_95] : memref<1x64x2xf32, #tpu.memory_space<vmem>>, vector<1x64x2xf32>
    %65 = vector.shape_cast %64 : vector<1x64x2xf32> to vector<64x2xf32>
    %66 = vector.shape_cast %63 : vector<64x2xf32> to vector<1x64x2xf32>
    tpu.vector_store %arg5[%c0_93, %c0_94, %c0_95], %66 {strides = array<i32>} : memref<1x64x2xf32, #tpu.memory_space<vmem>>, vector<1x64x2xf32>,
    return
  }
  func.func @transform_0(%arg0: i32) -> (i32, i32, i32, i32) {
    %c0_i32 = arith.constant 0 : i32
    %c0_i32_0 = arith.constant 0 : i32
    %c0_i32_1 = arith.constant 0 : i32
    %c0_i32_2 = arith.constant 0 : i32
    return %arg0, %c0_i32, %c0_i32_0, %c0_i32_1 : i32, i32, i32, i32
  }
  func.func @transform_1(%arg0: i32) -> (i32, i32) {
    %c0_i32 = arith.constant 0 : i32
    %c0_i32_0 = arith.constant 0 : i32
    %c0_i32_1 = arith.constant 0 : i32
    return %c0_i32, %c0_i32_0 : i32, i32
  }
  func.func @transform_2(%arg0: i32) -> (i32, i32) {
    %c0_i32 = arith.constant 0 : i32
    %c0_i32_0 = arith.constant 0 : i32
    %c0_i32_1 = arith.constant 0 : i32
    return %c0_i32, %c0_i32_0 : i32, i32
  }
  func.func @transform_3(%arg0: i32) -> (i32, i32, i32) {
    %c0_i32 = arith.constant 0 : i32
    %c0_i32_0 = arith.constant 0 : i32
    %c0_i32_1 = arith.constant 0 : i32
    return %arg0, %c0_i32, %c0_i32_0 : i32, i32, i32
  }
  func.func @transform_4(%arg0: i32) -> (i32, i32, i32) {
    %c0_i32 = arith.constant 0 : i32
    %c0_i32_0 = arith.constant 0 : i32
    %c0_i32_1 = arith.constant 0 : i32
    return %arg0, %c0_i32, %c0_i32_0 : i32, i32, i32
  }
}

</mosaic_0001>

<llo_original>
// kernel: tpu_custom_call.1
$region0: #{tpu_custom_call.1}
  #allocation0 [shape = 'u32[]', space=smem, size = 0x4, offset = 0x4, fixed_abs, tag = 'smem constant byte address 0x4 - core index']
  #allocation1 [shape = 'u32[72,128]{1,0:T(1,128)}', space=vmem, size = 0x9000, scoped, tag = 'internal scratch']
  #allocation2 [shape = 'f32[18,18,4]{2,1,0:T(8,128)}', space=vmem, size = 0x36000, scoped, tag = 'scratch operand']
  #allocation3 [shape = 'f32[10,10,4]{2,1,0:T(8,128)}', space=vmem, size = 0x14000, scoped, tag = 'scratch operand']
  %s0 = inlined_call_operand.vmem [shape: f32[2,16,16,4], index: 0, kind: input, shape index: {}]
  %s1 = inlined_call_operand.vmem [shape: f32[36,2], index: 1, kind: input, shape index: {}]
  %s2 = inlined_call_operand.vmem [shape: f32[36,2], index: 2, kind: input, shape index: {}]
  %s3 = inlined_call_operand.vmem [shape: f32[2,256,2], index: 3, kind: output, shape index: {0}]
  %s4 = inlined_call_operand.vmem [shape: f32[2,64,2], index: 4, kind: output, shape index: {1}]
  %5 = xla_tuple %s3, %s4
  %s6 = sld [smem:[#allocation0]]
  $region53: #{tpu_custom_call.1} parent=0
    _
  %s8 = ssub.s32 1, %s6
  %s9 = scalar_select 0, %s8, %s6
  loop: start=0, step=1, limit=4
  $region2: #{tpu_custom_call.1} parent=0 // loop_pre_header
    _
  $region3: #{tpu_custom_call.1} parent=0 // loop_header
    %s11 = sphi 0, %s15
    %p12 = scmp.ge.s32.totalorder %s11, 4
    %s21 = sphi 0, %s23
    %s24 = sphi 0, %s21
    %s25 = sphi 0, %s24
    %s41 = sphi 0, %s25
    %s45 = sphi 0, %s45
    %s47 = sphi 0, %s45
    %s48 = sphi 0, %s47
    %s62 = sphi 0, %s48
    %s66 = sphi 0, %s66
    %s68 = sphi 0, %s66
    %s69 = sphi 0, %s68
    %s83 = sphi 0, %s69
    %s89 = sphi 0, %s91
    %s92 = sphi 0, %s89
    %s93 = sphi 0, %s92
    %s109 = sphi 0, %s93
    %s115 = sphi 0, %s117
    %s118 = sphi 0, %s115
    %s119 = sphi 0, %s118
    %s135 = sphi 0, %s119
  $region4: #{tpu_custom_call.1} parent=0 // loop_header_branch
    %14 = sbr.rel (%p12) target = $region8
  $region5: #{tpu_custom_call.1} parent=0 // loop_body
    %s16 = ssub.s32 %s11, 1
    %s17 = ssub.s32 %s11, 2
    %s18 = sadd.s32 %s11, 1
    %s19 = ssub.s32 %s11, %s18
    %p20 = scmp.eq.s32.totalorder %s19, 0
    %s22 = sadd.s32 %s21, 1
    %s23 = scalar_select %p20, %s21, %s22
    %p26 = pneg %p20
    %p27 = scmp.eq.s32.totalorder %s11, 1
    %p28 = por %p26, %p27
    %p29 = scmp.ne.s32.totalorder %s21, %s24
    %p30 = scmp.eq.s32.totalorder %s11, 0
    %p31 = por %p29, %p30
    %p32 = scmp.ne.s32.totalorder %s21, %s24
    %p33 = scmp.eq.s32.totalorder %s16, 1
    %p34 = por %p32, %p33
    %p35 = scmp.ne.s32.totalorder %s24, %s25
    %p36 = scmp.eq.s32.totalorder %s16, 0
    %p37 = por %p35, %p36
    %p38 = scmp.ne.s32.totalorder %s24, %s25
    %p39 = scmp.eq.s32.totalorder %s17, 1
    %p40 = por %p38, %p39
    %p42 = scmp.ne.s32.totalorder %s25, %s41
    %p43 = scmp.eq.s32.totalorder %s17, 0
    %p44 = por %p42, %p43
    %s46 = sadd.s32 %s45, 1
    %p49 = scmp.eq.s32.totalorder %s11, 1
    %p50 = scmp.ne.s32.totalorder %s45, %s47
    %p51 = scmp.eq.s32.totalorder %s11, 0
    %p52 = por %p50, %p51
    %p53 = scmp.ne.s32.totalorder %s45, %s47
    %p54 = scmp.eq.s32.totalorder %s16, 1
    %p55 = por %p53, %p54
    %p56 = scmp.ne.s32.totalorder %s47, %s48
    %p57 = scmp.eq.s32.totalorder %s16, 0
    %p58 = por %p56, %p57
    %p59 = scmp.ne.s32.totalorder %s47, %s48
    %p60 = scmp.eq.s32.totalorder %s17, 1
    %p61 = por %p59, %p60
    %p63 = scmp.ne.s32.totalorder %s48, %s62
    %p64 = scmp.eq.s32.totalorder %s17, 0
    %p65 = por %p63, %p64
    %s67 = sadd.s32 %s66, 1
    %p70 = scmp.eq.s32.totalorder %s11, 1
    %p71 = scmp.ne.s32.totalorder %s66, %s68
    %p72 = scmp.eq.s32.totalorder %s11, 0
    %p73 = por %p71, %p72
    %p74 = scmp.ne.s32.totalorder %s66, %s68
    %p75 = scmp.eq.s32.totalorder %s16, 1
    %p76 = por %p74, %p75
    %p77 = scmp.ne.s32.totalorder %s68, %s69
    %p78 = scmp.eq.s32.totalorder %s16, 0
    %p79 = por %p77, %p78
    %p80 = scmp.ne.s32.totalorder %s68, %s69
    %p81 = scmp.eq.s32.totalorder %s17, 1
    %p82 = por %p80, %p81
    %p84 = scmp.ne.s32.totalorder %s69, %s83
    %p85 = scmp.eq.s32.totalorder %s17, 0
    %p86 = por %p84, %p85
    %s87 = ssub.s32 %s11, %s18
    %p88 = scmp.eq.s32.totalorder %s87, 0
    %s90 = sadd.s32 %s89, 1
    %s91 = scalar_select %p88, %s89, %s90
    %p94 = pneg %p88
    %p95 = scmp.eq.s32.totalorder %s11, 1
    %p96 = por %p94, %p95
    %p97 = scmp.ne.s32.totalorder %s89, %s92
    %p98 = scmp.eq.s32.totalorder %s11, 0
    %p99 = por %p97, %p98
    %p100 = scmp.ne.s32.totalorder %s89, %s92
    %p101 = scmp.eq.s32.totalorder %s16, 1
    %p102 = por %p100, %p101
    %p103 = scmp.ne.s32.totalorder %s92, %s93
    %p104 = scmp.eq.s32.totalorder %s16, 0
    %p105 = por %p103, %p104
    %p106 = scmp.ne.s32.totalorder %s92, %s93
    %p107 = scmp.eq.s32.totalorder %s17, 1
    %p108 = por %p106, %p107
    %p110 = scmp.ne.s32.totalorder %s93, %s109
    %p111 = scmp.eq.s32.totalorder %s17, 0
    %p112 = por %p110, %p111
    %s113 = ssub.s32 %s11, %s18
    %p114 = scmp.eq.s32.totalorder %s113, 0
    %s116 = sadd.s32 %s115, 1
    %s117 = scalar_select %p114, %s115, %s116
    %p120 = pneg %p114
    %p121 = scmp.eq.s32.totalorder %s11, 1
    %p122 = por %p120, %p121
    %p123 = scmp.ne.s32.totalorder %s115, %s118
    %p124 = scmp.eq.s32.totalorder %s11, 0
    %p125 = por %p123, %p124
    %p126 = scmp.ne.s32.totalorder %s115, %s118
    %p127 = scmp.eq.s32.totalorder %s16, 1
    %p128 = por %p126, %p127
    %p129 = scmp.ne.s32.totalorder %s118, %s119
    %p130 = scmp.eq.s32.totalorder %s16, 0
    %p131 = por %p129, %p130
    %p132 = scmp.ne.s32.totalorder %s118, %s119
    %p133 = scmp.eq.s32.totalorder %s17, 1
    %p134 = por %p132, %p133
    %p136 = scmp.ne.s32.totalorder %s119, %s135
    %p137 = scmp.eq.s32.totalorder %s17, 0
    %p138 = por %p136, %p137
    %p139 = scmp.le.s32.totalorder 1, %s11
    %p140 = scmp.lt.s32.totalorder %s11, 3
    %p141 = pnand %p139, %p140
    %p142 = pneg %p141
    // Predicated region
    $region9: #{tpu_custom_call.1} parent=5 // pred_check
      _
    $region10: #{tpu_custom_call.1} parent=5 // pred_check_branch
      %144 = sbr.rel (%p141) target = $region12
    $region11: #{tpu_custom_call.1} parent=5 // pred_region
      %s145 = ssub.s32 %s11, 1
      // Predicated region
      $region13: #{tpu_custom_call.1} parent=11 // pred_check
        %p146 = pneg %p58
      $region14: #{tpu_custom_call.1} parent=11 // pred_check_branch
        %148 = sbr.rel (%p146) target = $region16
      $region15: #{tpu_custom_call.1} parent=11 // pred_region
        _
      $region16: #{tpu_custom_call.1} parent=11 // pred_fallthru
        _
      // Predicated region
      $region17: #{tpu_custom_call.1} parent=11 // pred_check
        %p149 = pneg %p79
      $region18: #{tpu_custom_call.1} parent=11 // pred_check_branch
        %151 = sbr.rel (%p149) target = $region20
      $region19: #{tpu_custom_call.1} parent=11 // pred_region
        _
      $region20: #{tpu_custom_call.1} parent=11 // pred_fallthru
        _
    $region12: #{tpu_custom_call.1} parent=5 // pred_fallthru
      _
    %p152 = scmp.lt.s32.totalorder %s11, 2
    // Predicated region
    $region21: #{tpu_custom_call.1} parent=5 // pred_check
      %p153 = pneg %p152
    $region22: #{tpu_custom_call.1} parent=5 // pred_check_branch
      %155 = sbr.rel (%p153) target = $region24
    $region23: #{tpu_custom_call.1} parent=5 // pred_region
      // Predicated region
      $region25: #{tpu_custom_call.1} parent=23 // pred_check
        %p156 = pneg %p31
      $region26: #{tpu_custom_call.1} parent=23 // pred_check_branch
        %158 = sbr.rel (%p156) target = $region28
      $region27: #{tpu_custom_call.1} parent=23 // pred_region
        %p159 = scmp.lt.s32.totalorder %s11, 1
        %s160 = scalar_select %p159, %s11, 1
        %s161 = smul.addr %s160, 32
        %s162 = smul.addr %s161, 8
        %s163 = scalar_lea.vmem %s0, %s162
      $region28: #{tpu_custom_call.1} parent=23 // pred_fallthru
        _
    $region24: #{tpu_custom_call.1} parent=5 // pred_fallthru
      _
    %p164 = scmp.le.s32.totalorder 1, %s11
    %p165 = scmp.lt.s32.totalorder %s11, 3
    %p166 = pnand %p164, %p165
    %p167 = pneg %p166
    // Predicated region
    $region29: #{tpu_custom_call.1} parent=5 // pred_check
      _
    $region30: #{tpu_custom_call.1} parent=5 // pred_check_branch
      %169 = sbr.rel (%p166) target = $region32
    $region31: #{tpu_custom_call.1} parent=5 // pred_region
      %s170 = ssub.s32 %s11, 1
      %p171 = scmp.lt.s32.totalorder %s16, 1
      %s172 = scalar_select %p171, %s16, 1
      %s173 = smul.addr %s172, 32
      %s174 = smul.addr %s173, 8
      %s175 = scalar_lea.vmem %s0, %s174
      %p176 = pneg %p37
      %p177 = pneg %p34
      %p178 = pneg %p58
      %p179 = pneg %p55
      %p180 = pneg %p79
      %p181 = pneg %p76
      %p182 = pneg %p105
      %p183 = pneg %p102
      %p184 = scmp.lt.s32.totalorder %s16, 1
      %s185 = scalar_select %p184, %s16, 1
      %s186 = smul.addr %s185, 32
      %s187 = smul.addr %s186, 8
      %s188 = scalar_lea.vmem %s3, %s187
      %p189 = pneg %p131
      %p190 = pneg %p128
      %p191 = scmp.lt.s32.totalorder %s16, 1
      %s192 = scalar_select %p191, %s16, 1
      %s193 = smul.addr %s192, 8
      %s194 = smul.addr %s193, 8
      %s195 = scalar_lea.vmem %s4, %s194
      %p196 = scmp.lt.s32.totalorder %s16, 1
      %s197 = scalar_select %p196, %s16, 1
      %s198 = smul.addr %s197, 32
      %s199 = smul.addr %s198, 8
      %s200 = scalar_lea.vmem %s0, %s199
      %p201 = scmp.lt.s32.totalorder %s16, 1
      %s202 = scalar_select %p201, %s16, 1
      %s203 = smul.addr %s202, 32
      %s204 = smul.addr %s203, 8
      %s205 = scalar_lea.vmem %s3, %s204
      %p206 = scmp.lt.s32.totalorder %s16, 1
      %s207 = scalar_select %p206, %s16, 1
      %s208 = smul.addr %s207, 8
      %s209 = smul.addr %s208, 8
      %s210 = scalar_lea.vmem %s4, %s209
      %vm211 = vcmask 31744
      %212 = vst.msk [vmem:[#allocation2] sm:$0xff] %vm211, 0.0
      %213 = vst.msk [vmem:[#allocation2 + $0x8] sm:$0xff] %vm211, 0.0
      %vm214 = vcmask 25600
      %215 = vst.msk [vmem:[#allocation2 + $0x10] sm:$0x3] %vm214, 0.0
      %216 = vst.msk [vmem:[#allocation2 + $0x18] sm:$0xff] %vm211, 0.0
      %217 = vst.msk [vmem:[#allocation2 + $0x20] sm:$0xff] %vm211, 0.0
      %218 = vst.msk [vmem:[#allocation2 + $0x28] sm:$0x3] %vm214, 0.0
      %219 = vst.msk [vmem:[#allocation2 + $0x30] sm:$0xff] %vm211, 0.0
      %220 = vst.msk [vmem:[#allocation2 + $0x38] sm:$0xff] %vm211, 0.0
      %221 = vst.msk [vmem:[#allocation2 + $0x40] sm:$0x3] %vm214, 0.0
      %222 = vst.msk [vmem:[#allocation2 + $0x48] sm:$0xff] %vm211, 0.0
      %223 = vst.msk [vmem:[#allocation2 + $0x50] sm:$0xff] %vm211, 0.0
      %224 = vst.msk [vmem:[#allocation2 + $0x58] sm:$0x3] %vm214, 0.0
      %225 = vst.msk [vmem:[#allocation2 + $0x60] sm:$0xff] %vm211, 0.0
      %226 = vst.msk [vmem:[#allocation2 + $0x68] sm:$0xff] %vm211, 0.0
      %227 = vst.msk [vmem:[#allocation2 + $0x70] sm:$0x3] %vm214, 0.0
      %228 = vst.msk [vmem:[#allocation2 + $0x78] sm:$0xff] %vm211, 0.0
      %229 = vst.msk [vmem:[#allocation2 + $0x80] sm:$0xff] %vm211, 0.0
      %230 = vst.msk [vmem:[#allocation2 + $0x88] sm:$0x3] %vm214, 0.0
      %231 = vst.msk [vmem:[#allocation2 + $0x90] sm:$0xff] %vm211, 0.0
      %232 = vst.msk [vmem:[#allocation2 + $0x98] sm:$0xff] %vm211, 0.0
      %233 = vst.msk [vmem:[#allocation2 + $0xa0] sm:$0x3] %vm214, 0.0
      %234 = vst.msk [vmem:[#allocation2 + $0xa8] sm:$0xff] %vm211, 0.0
      %235 = vst.msk [vmem:[#allocation2 + $0xb0] sm:$0xff] %vm211, 0.0
      %236 = vst.msk [vmem:[#allocation2 + $0xb8] sm:$0x3] %vm214, 0.0
      %237 = vst.msk [vmem:[#allocation2 + $0xc0] sm:$0xff] %vm211, 0.0
      %238 = vst.msk [vmem:[#allocation2 + $0xc8] sm:$0xff] %vm211, 0.0
      %239 = vst.msk [vmem:[#allocation2 + $0xd0] sm:$0x3] %vm214, 0.0
      %240 = vst.msk [vmem:[#allocation2 + $0xd8] sm:$0xff] %vm211, 0.0
      %241 = vst.msk [vmem:[#allocation2 + $0xe0] sm:$0xff] %vm211, 0.0
      %242 = vst.msk [vmem:[#allocation2 + $0xe8] sm:$0x3] %vm214, 0.0
      %243 = vst.msk [vmem:[#allocation2 + $0xf0] sm:$0xff] %vm211, 0.0
      %244 = vst.msk [vmem:[#allocation2 + $0xf8] sm:$0xff] %vm211, 0.0
      %245 = vst.msk [vmem:[#allocation2 + $0x100] sm:$0x3] %vm214, 0.0
      %246 = vst.msk [vmem:[#allocation2 + $0x108] sm:$0xff] %vm211, 0.0
      %247 = vst.msk [vmem:[#allocation2 + $0x110] sm:$0xff] %vm211, 0.0
      %248 = vst.msk [vmem:[#allocation2 + $0x118] sm:$0x3] %vm214, 0.0
      %249 = vst.msk [vmem:[#allocation2 + $0x120] sm:$0xff] %vm211, 0.0
      %250 = vst.msk [vmem:[#allocation2 + $0x128] sm:$0xff] %vm211, 0.0
      %251 = vst.msk [vmem:[#allocation2 + $0x130] sm:$0x3] %vm214, 0.0
      %252 = vst.msk [vmem:[#allocation2 + $0x138] sm:$0xff] %vm211, 0.0
      %253 = vst.msk [vmem:[#allocation2 + $0x140] sm:$0xff] %vm211, 0.0
      %254 = vst.msk [vmem:[#allocation2 + $0x148] sm:$0x3] %vm214, 0.0
      %255 = vst.msk [vmem:[#allocation2 + $0x150] sm:$0xff] %vm211, 0.0
      %256 = vst.msk [vmem:[#allocation2 + $0x158] sm:$0xff] %vm211, 0.0
      %257 = vst.msk [vmem:[#allocation2 + $0x160] sm:$0x3] %vm214, 0.0
      %258 = vst.msk [vmem:[#allocation2 + $0x168] sm:$0xff] %vm211, 0.0
      %259 = vst.msk [vmem:[#allocation2 + $0x170] sm:$0xff] %vm211, 0.0
      %260 = vst.msk [vmem:[#allocation2 + $0x178] sm:$0x3] %vm214, 0.0
      %261 = vst.msk [vmem:[#allocation2 + $0x180] sm:$0xff] %vm211, 0.0
      %262 = vst.msk [vmem:[#allocation2 + $0x188] sm:$0xff] %vm211, 0.0
      %263 = vst.msk [vmem:[#allocation2 + $0x190] sm:$0x3] %vm214, 0.0
      %264 = vst.msk [vmem:[#allocation2 + $0x198] sm:$0xff] %vm211, 0.0
      %265 = vst.msk [vmem:[#allocation2 + $0x1a0] sm:$0xff] %vm211, 0.0
      %266 = vst.msk [vmem:[#allocation2 + $0x1a8] sm:$0x3] %vm214, 0.0
      %267 = vst.msk [vmem:[#allocation3] sm:$0xff] %vm211, 0.0
      %268 = vst.msk [vmem:[#allocation3 + $0x8] sm:$0x3] %vm214, 0.0
      %269 = vst.msk [vmem:[#allocation3 + $0x10] sm:$0xff] %vm211, 0.0
      %270 = vst.msk [vmem:[#allocation3 + $0x18] sm:$0x3] %vm214, 0.0
      %271 = vst.msk [vmem:[#allocation3 + $0x20] sm:$0xff] %vm211, 0.0
      %272 = vst.msk [vmem:[#allocation3 + $0x28] sm:$0x3] %vm214, 0.0
      %273 = vst.msk [vmem:[#allocation3 + $0x30] sm:$0xff] %vm211, 0.0
      %274 = vst.msk [vmem:[#allocation3 + $0x38] sm:$0x3] %vm214, 0.0
      %275 = vst.msk [vmem:[#allocation3 + $0x40] sm:$0xff] %vm211, 0.0
      %276 = vst.msk [vmem:[#allocation3 + $0x48] sm:$0x3] %vm214, 0.0
      %277 = vst.msk [vmem:[#allocation3 + $0x50] sm:$0xff] %vm211, 0.0
      %278 = vst.msk [vmem:[#allocation3 + $0x58] sm:$0x3] %vm214, 0.0
      %279 = vst.msk [vmem:[#allocation3 + $0x60] sm:$0xff] %vm211, 0.0
      %280 = vst.msk [vmem:[#allocation3 + $0x68] sm:$0x3] %vm214, 0.0
      %281 = vst.msk [vmem:[#allocation3 + $0x70] sm:$0xff] %vm211, 0.0
      %282 = vst.msk [vmem:[#allocation3 + $0x78] sm:$0x3] %vm214, 0.0
      %283 = vst.msk [vmem:[#allocation3 + $0x80] sm:$0xff] %vm211, 0.0
      %284 = vst.msk [vmem:[#allocation3 + $0x88] sm:$0x3] %vm214, 0.0
      %285 = vst.msk [vmem:[#allocation3 + $0x90] sm:$0xff] %vm211, 0.0
      %286 = vst.msk [vmem:[#allocation3 + $0x98] sm:$0x3] %vm214, 0.0
      %v287 = vld [vmem:[%s200] sm:$0xff]
      %v288 = vld [vmem:[%s200 + $0x8] sm:$0xff]
      %v289 = vld [vmem:[%s200 + $0x10] sm:$0xff]
      %v290 = vld [vmem:[%s200 + $0x18] sm:$0xff]
      %v291 = vld [vmem:[%s200 + $0x20] sm:$0xff]
      %v292 = vld [vmem:[%s200 + $0x28] sm:$0xff]
      %v293 = vld [vmem:[%s200 + $0x30] sm:$0xff]
      %v294 = vld [vmem:[%s200 + $0x38] sm:$0xff]
      %v295 = vld [vmem:[%s200 + $0x40] sm:$0xff]
      %v296 = vld [vmem:[%s200 + $0x48] sm:$0xff]
      %v297 = vld [vmem:[%s200 + $0x50] sm:$0xff]
      %v298 = vld [vmem:[%s200 + $0x58] sm:$0xff]
      %v299 = vld [vmem:[%s200 + $0x60] sm:$0xff]
      %v300 = vld [vmem:[%s200 + $0x68] sm:$0xff]
      %v301 = vld [vmem:[%s200 + $0x70] sm:$0xff]
      %v302 = vld [vmem:[%s200 + $0x78] sm:$0xff]
      %v303 = vld [vmem:[%s200 + $0x80] sm:$0xff]
      %v304 = vld [vmem:[%s200 + $0x88] sm:$0xff]
      %v305 = vld [vmem:[%s200 + $0x90] sm:$0xff]
      %v306 = vld [vmem:[%s200 + $0x98] sm:$0xff]
      %v307 = vld [vmem:[%s200 + $0xa0] sm:$0xff]
      %v308 = vld [vmem:[%s200 + $0xa8] sm:$0xff]
      %v309 = vld [vmem:[%s200 + $0xb0] sm:$0xff]
      %v310 = vld [vmem:[%s200 + $0xb8] sm:$0xff]
      %v311 = vld [vmem:[%s200 + $0xc0] sm:$0xff]
      %v312 = vld [vmem:[%s200 + $0xc8] sm:$0xff]
      %v313 = vld [vmem:[%s200 + $0xd0] sm:$0xff]
      %v314 = vld [vmem:[%s200 + $0xd8] sm:$0xff]
      %v315 = vld [vmem:[%s200 + $0xe0] sm:$0xff]
      %v316 = vld [vmem:[%s200 + $0xe8] sm:$0xff]
      %v317 = vld [vmem:[%s200 + $0xf0] sm:$0xff]
      %v318 = vld [vmem:[%s200 + $0xf8] sm:$0xff]
      %s319 = scalar_lea.vmem [#allocation2], 24
      %320 = vst.msk [vmem:[%s319 + $0x1] sm:$0xff] %vm211, %v287
      %321 = vst.msk [vmem:[%s319 + $0x9] sm:$0xff] %vm211, %v288
      %322 = vst.msk [vmem:[%s319 + $0x19] sm:$0xff] %vm211, %v289
      %323 = vst.msk [vmem:[%s319 + $0x21] sm:$0xff] %vm211, %v290
      %324 = vst.msk [vmem:[%s319 + $0x31] sm:$0xff] %vm211, %v291
      %325 = vst.msk [vmem:[%s319 + $0x39] sm:$0xff] %vm211, %v292
      %326 = vst.msk [vmem:[%s319 + $0x49] sm:$0xff] %vm211, %v293
      %327 = vst.msk [vmem:[%s319 + $0x51] sm:$0xff] %vm211, %v294
      %328 = vst.msk [vmem:[%s319 + $0x61] sm:$0xff] %vm211, %v295
      %329 = vst.msk [vmem:[%s319 + $0x69] sm:$0xff] %vm211, %v296
      %330 = vst.msk [vmem:[%s319 + $0x79] sm:$0xff] %vm211, %v297
      %331 = vst.msk [vmem:[%s319 + $0x81] sm:$0xff] %vm211, %v298
      %332 = vst.msk [vmem:[%s319 + $0x91] sm:$0xff] %vm211, %v299
      %333 = vst.msk [vmem:[%s319 + $0x99] sm:$0xff] %vm211, %v300
      %334 = vst.msk [vmem:[%s319 + $0xa9] sm:$0xff] %vm211, %v301
      %335 = vst.msk [vmem:[%s319 + $0xb1] sm:$0xff] %vm211, %v302
      %336 = vst.msk [vmem:[%s319 + $0xc1] sm:$0xff] %vm211, %v303
      %337 = vst.msk [vmem:[%s319 + $0xc9] sm:$0xff] %vm211, %v304
      %338 = vst.msk [vmem:[%s319 + $0xd9] sm:$0xff] %vm211, %v305
      %339 = vst.msk [vmem:[%s319 + $0xe1] sm:$0xff] %vm211, %v306
      %340 = vst.msk [vmem:[%s319 + $0xf1] sm:$0xff] %vm211, %v307
      %341 = vst.msk [vmem:[%s319 + $0xf9] sm:$0xff] %vm211, %v308
      %342 = vst.msk [vmem:[%s319 + $0x109] sm:$0xff] %vm211, %v309
      %343 = vst.msk [vmem:[%s319 + $0x111] sm:$0xff] %vm211, %v310
      %344 = vst.msk [vmem:[%s319 + $0x121] sm:$0xff] %vm211, %v311
      %345 = vst.msk [vmem:[%s319 + $0x129] sm:$0xff] %vm211, %v312
      %346 = vst.msk [vmem:[%s319 + $0x139] sm:$0xff] %vm211, %v313
      %347 = vst.msk [vmem:[%s319 + $0x141] sm:$0xff] %vm211, %v314
      %348 = vst.msk [vmem:[%s319 + $0x151] sm:$0xff] %vm211, %v315
      %349 = vst.msk [vmem:[%s319 + $0x159] sm:$0xff] %vm211, %v316
      %350 = vst.msk [vmem:[%s319 + $0x169] sm:$0xff] %vm211, %v317
      %351 = vst.msk [vmem:[%s319 + $0x171] sm:$0xff] %vm211, %v318
      %v352 = vld [vmem:[%s200] ss:$2 sm:$0xff]
      %s353 = scalar_lea.vmem %s200, 32
      %v354 = vld [vmem:[%s353] ss:$2 sm:$0xff]
      %s355 = scalar_lea.vmem %s200, 64
      %v356 = vld [vmem:[%s355] ss:$2 sm:$0xff]
      %s357 = scalar_lea.vmem %s200, 96
      %v358 = vld [vmem:[%s357] ss:$2 sm:$0xff]
      %s359 = scalar_lea.vmem %s200, 128
      %v360 = vld [vmem:[%s359] ss:$2 sm:$0xff]
      %s361 = scalar_lea.vmem %s200, 160
      %v362 = vld [vmem:[%s361] ss:$2 sm:$0xff]
      %s363 = scalar_lea.vmem %s200, 192
      %v364 = vld [vmem:[%s363] ss:$2 sm:$0xff]
      %s365 = scalar_lea.vmem %s200, 224
      %v366 = vld [vmem:[%s365] ss:$2 sm:$0xff]
      %s367 = scalar_lea.vmem %s200, 1
      %v368 = vld [vmem:[%s367] ss:$2 sm:$0xff]
      %s369 = scalar_lea.vmem %s200, 33
      %v370 = vld [vmem:[%s369] ss:$2 sm:$0xff]
      %s371 = scalar_lea.vmem %s200, 65
      %v372 = vld [vmem:[%s371] ss:$2 sm:$0xff]
      %s373 = scalar_lea.vmem %s200, 97
      %v374 = vld [vmem:[%s373] ss:$2 sm:$0xff]
      %s375 = scalar_lea.vmem %s200, 129
      %v376 = vld [vmem:[%s375] ss:$2 sm:$0xff]
      %s377 = scalar_lea.vmem %s200, 161
      %v378 = vld [vmem:[%s377] ss:$2 sm:$0xff]
      %s379 = scalar_lea.vmem %s200, 193
      %v380 = vld [vmem:[%s379] ss:$2 sm:$0xff]
      %s381 = scalar_lea.vmem %s200, 225
      %v382 = vld [vmem:[%s381] ss:$2 sm:$0xff]
      %v383 = vadd.f32 %v352, %v368
      %v384 = vadd.f32 %v354, %v370
      %v385 = vadd.f32 %v356, %v372
      %v386 = vadd.f32 %v358, %v374
      %v387 = vadd.f32 %v360, %v376
      %v388 = vadd.f32 %v362, %v378
      %v389 = vadd.f32 %v364, %v380
      %v390 = vadd.f32 %v366, %v382
      %s391 = scalar_lea.vmem %s200, 16
      %v392 = vld [vmem:[%s391] ss:$2 sm:$0xff]
      %s393 = scalar_lea.vmem %s391, 32
      %v394 = vld [vmem:[%s393] ss:$2 sm:$0xff]
      %s395 = scalar_lea.vmem %s391, 64
      %v396 = vld [vmem:[%s395] ss:$2 sm:$0xff]
      %s397 = scalar_lea.vmem %s391, 96
      %v398 = vld [vmem:[%s397] ss:$2 sm:$0xff]
      %s399 = scalar_lea.vmem %s391, 128
      %v400 = vld [vmem:[%s399] ss:$2 sm:$0xff]
      %s401 = scalar_lea.vmem %s391, 160
      %v402 = vld [vmem:[%s401] ss:$2 sm:$0xff]
      %s403 = scalar_lea.vmem %s391, 192
      %v404 = vld [vmem:[%s403] ss:$2 sm:$0xff]
      %s405 = scalar_lea.vmem %s391, 224
      %v406 = vld [vmem:[%s405] ss:$2 sm:$0xff]
      %v407 = vadd.f32 %v383, %v392
      %v408 = vadd.f32 %v384, %v394
      %v409 = vadd.f32 %v385, %v396
      %v410 = vadd.f32 %v386, %v398
      %v411 = vadd.f32 %v387, %v400
      %v412 = vadd.f32 %v388, %v402
      %v413 = vadd.f32 %v389, %v404
      %v414 = vadd.f32 %v390, %v406
      %s415 = scalar_lea.vmem %s391, 1
      %v416 = vld [vmem:[%s415] ss:$2 sm:$0xff]
      %s417 = scalar_lea.vmem %s391, 33
      %v418 = vld [vmem:[%s417] ss:$2 sm:$0xff]
      %s419 = scalar_lea.vmem %s391, 65
      %v420 = vld [vmem:[%s419] ss:$2 sm:$0xff]
      %s421 = scalar_lea.vmem %s391, 97
      %v422 = vld [vmem:[%s421] ss:$2 sm:$0xff]
      %s423 = scalar_lea.vmem %s391, 129
      %v424 = vld [vmem:[%s423] ss:$2 sm:$0xff]
      %s425 = scalar_lea.vmem %s391, 161
      %v426 = vld [vmem:[%s425] ss:$2 sm:$0xff]
      %s427 = scalar_lea.vmem %s391, 193
      %v428 = vld [vmem:[%s427] ss:$2 sm:$0xff]
      %s429 = scalar_lea.vmem %s391, 225
      %v430 = vld [vmem:[%s429] ss:$2 sm:$0xff]
      %v431 = vadd.f32 %v407, %v416
      %v432 = vadd.f32 %v408, %v418
      %v433 = vadd.f32 %v409, %v420
      %v434 = vadd.f32 %v410, %v422
      %v435 = vadd.f32 %v411, %v424
      %v436 = vadd.f32 %v412, %v426
      %v437 = vadd.f32 %v413, %v428
      %v438 = vadd.f32 %v414, %v430
      %s439 = scalar_lea.vmem [#allocation3], 16
      %440 = vst.msk [vmem:[%s439 + $0x1] sm:$0xff] %vm211, %v431
      %441 = vst.msk [vmem:[%s439 + $0x11] sm:$0xff] %vm211, %v432
      %442 = vst.msk [vmem:[%s439 + $0x21] sm:$0xff] %vm211, %v433
      %443 = vst.msk [vmem:[%s439 + $0x31] sm:$0xff] %vm211, %v434
      %444 = vst.msk [vmem:[%s439 + $0x41] sm:$0xff] %vm211, %v435
      %445 = vst.msk [vmem:[%s439 + $0x51] sm:$0xff] %vm211, %v436
      %446 = vst.msk [vmem:[%s439 + $0x61] sm:$0xff] %vm211, %v437
      %447 = vst.msk [vmem:[%s439 + $0x71] sm:$0xff] %vm211, %v438
      %v448 = vld [vmem:[#allocation2] sm:$0xff]
      %v449 = vld [vmem:[#allocation2 + $0x8] sm:$0xff]
      %v450 = vld [vmem:[#allocation2 + $0x18] sm:$0xff]
      %v451 = vld [vmem:[#allocation2 + $0x20] sm:$0xff]
      %v452 = vld [vmem:[#allocation2 + $0x30] sm:$0xff]
      %v453 = vld [vmem:[#allocation2 + $0x38] sm:$0xff]
      %v454 = vld [vmem:[#allocation2 + $0x48] sm:$0xff]
      %v455 = vld [vmem:[#allocation2 + $0x50] sm:$0xff]
      %v456 = vld [vmem:[#allocation2 + $0x60] sm:$0xff]
      %v457 = vld [vmem:[#allocation2 + $0x68] sm:$0xff]
      %v458 = vld [vmem:[#allocation2 + $0x78] sm:$0xff]
      %v459 = vld [vmem:[#allocation2 + $0x80] sm:$0xff]
      %v460 = vld [vmem:[#allocation2 + $0x90] sm:$0xff]
      %v461 = vld [vmem:[#allocation2 + $0x98] sm:$0xff]
      %v462 = vld [vmem:[#allocation2 + $0xa8] sm:$0xff]
      %v463 = vld [vmem:[#allocation2 + $0xb0] sm:$0xff]
      %v464 = vld [vmem:[#allocation2 + $0xc0] sm:$0xff]
      %v465 = vld [vmem:[#allocation2 + $0xc8] sm:$0xff]
      %v466 = vld [vmem:[#allocation2 + $0xd8] sm:$0xff]
      %v467 = vld [vmem:[#allocation2 + $0xe0] sm:$0xff]
      %v468 = vld [vmem:[#allocation2 + $0xf0] sm:$0xff]
      %v469 = vld [vmem:[#allocation2 + $0xf8] sm:$0xff]
      %v470 = vld [vmem:[#allocation2 + $0x108] sm:$0xff]
      %v471 = vld [vmem:[#allocation2 + $0x110] sm:$0xff]
      %v472 = vld [vmem:[#allocation2 + $0x120] sm:$0xff]
      %v473 = vld [vmem:[#allocation2 + $0x128] sm:$0xff]
      %v474 = vld [vmem:[#allocation2 + $0x138] sm:$0xff]
      %v475 = vld [vmem:[#allocation2 + $0x140] sm:$0xff]
      %v476 = vld [vmem:[#allocation2 + $0x150] sm:$0xff]
      %v477 = vld [vmem:[#allocation2 + $0x158] sm:$0xff]
      %v478 = vld [vmem:[#allocation2 + $0x168] sm:$0xff]
      %v479 = vld [vmem:[#allocation2 + $0x170] sm:$0xff]
      %v480 = vld [vmem:[#allocation2 + $0x1] sm:$0xff]
      %v481 = vld [vmem:[#allocation2 + $0x9] sm:$0xff]
      %v482 = vld [vmem:[#allocation2 + $0x19] sm:$0xff]
      %v483 = vld [vmem:[#allocation2 + $0x21] sm:$0xff]
      %v484 = vld [vmem:[#allocation2 + $0x31] sm:$0xff]
      %v485 = vld [vmem:[#allocation2 + $0x39] sm:$0xff]
      %v486 = vld [vmem:[#allocation2 + $0x49] sm:$0xff]
      %v487 = vld [vmem:[#allocation2 + $0x51] sm:$0xff]
      %v488 = vld [vmem:[#allocation2 + $0x61] sm:$0xff]
      %v489 = vld [vmem:[#allocation2 + $0x69] sm:$0xff]
      %v490 = vld [vmem:[#allocation2 + $0x79] sm:$0xff]
      %v491 = vld [vmem:[#allocation2 + $0x81] sm:$0xff]
      %v492 = vld [vmem:[#allocation2 + $0x91] sm:$0xff]
      %v493 = vld [vmem:[#allocation2 + $0x99] sm:$0xff]
      %v494 = vld [vmem:[#allocation2 + $0xa9] sm:$0xff]
      %v495 = vld [vmem:[#allocation2 + $0xb1] sm:$0xff]
      %v496 = vld [vmem:[#allocation2 + $0xc1] sm:$0xff]
      %v497 = vld [vmem:[#allocation2 + $0xc9] sm:$0xff]
      %v498 = vld [vmem:[#allocation2 + $0xd9] sm:$0xff]
      %v499 = vld [vmem:[#allocation2 + $0xe1] sm:$0xff]
      %v500 = vld [vmem:[#allocation2 + $0xf1] sm:$0xff]
      %v501 = vld [vmem:[#allocation2 + $0xf9] sm:$0xff]
      %v502 = vld [vmem:[#allocation2 + $0x109] sm:$0xff]
      %v503 = vld [vmem:[#allocation2 + $0x111] sm:$0xff]
      %v504 = vld [vmem:[#allocation2 + $0x121] sm:$0xff]
      %v505 = vld [vmem:[#allocation2 + $0x129] sm:$0xff]
      %v506 = vld [vmem:[#allocation2 + $0x139] sm:$0xff]
      %v507 = vld [vmem:[#allocation2 + $0x141] sm:$0xff]
      %v508 = vld [vmem:[#allocation2 + $0x151] sm:$0xff]
      %v509 = vld [vmem:[#allocation2 + $0x159] sm:$0xff]
      %v510 = vld [vmem:[#allocation2 + $0x169] sm:$0xff]
      %v511 = vld [vmem:[#allocation2 + $0x171] sm:$0xff]
      %v512 = vld [vmem:[#allocation2 + $0x2] sm:$0xff]
      %v513 = vld [vmem:[#allocation2 + $0xa] sm:$0xff]
      %v514 = vld [vmem:[#allocation2 + $0x1a] sm:$0xff]
      %v515 = vld [vmem:[#allocation2 + $0x22] sm:$0xff]
      %v516 = vld [vmem:[#allocation2 + $0x32] sm:$0xff]
      %v517 = vld [vmem:[#allocation2 + $0x3a] sm:$0xff]
      %v518 = vld [vmem:[#allocation2 + $0x4a] sm:$0xff]
      %v519 = vld [vmem:[#allocation2 + $0x52] sm:$0xff]
      %v520 = vld [vmem:[#allocation2 + $0x62] sm:$0xff]
      %v521 = vld [vmem:[#allocation2 + $0x6a] sm:$0xff]
      %v522 = vld [vmem:[#allocation2 + $0x7a] sm:$0xff]
      %v523 = vld [vmem:[#allocation2 + $0x82] sm:$0xff]
      %v524 = vld [vmem:[#allocation2 + $0x92] sm:$0xff]
      %v525 = vld [vmem:[#allocation2 + $0x9a] sm:$0xff]
      %v526 = vld [vmem:[#allocation2 + $0xaa] sm:$0xff]
      %v527 = vld [vmem:[#allocation2 + $0xb2] sm:$0xff]
      %v528 = vld [vmem:[#allocation2 + $0xc2] sm:$0xff]
      %v529 = vld [vmem:[#allocation2 + $0xca] sm:$0xff]
      %v530 = vld [vmem:[#allocation2 + $0xda] sm:$0xff]
      %v531 = vld [vmem:[#allocation2 + $0xe2] sm:$0xff]
      %v532 = vld [vmem:[#allocation2 + $0xf2] sm:$0xff]
      %v533 = vld [vmem:[#allocation2 + $0xfa] sm:$0xff]
      %v534 = vld [vmem:[#allocation2 + $0x10a] sm:$0xff]
      %v535 = vld [vmem:[#allocation2 + $0x112] sm:$0xff]
      %v536 = vld [vmem:[#allocation2 + $0x122] sm:$0xff]
      %v537 = vld [vmem:[#allocation2 + $0x12a] sm:$0xff]
      %v538 = vld [vmem:[#allocation2 + $0x13a] sm:$0xff]
      %v539 = vld [vmem:[#allocation2 + $0x142] sm:$0xff]
      %v540 = vld [vmem:[#allocation2 + $0x152] sm:$0xff]
      %v541 = vld [vmem:[#allocation2 + $0x15a] sm:$0xff]
      %v542 = vld [vmem:[#allocation2 + $0x16a] sm:$0xff]
      %v543 = vld [vmem:[#allocation2 + $0x172] sm:$0xff]
      %v544 = vld [vmem:[%s319] sm:$0xff]
      %v545 = vld [vmem:[%s319 + $0x8] sm:$0xff]
      %v546 = vld [vmem:[%s319 + $0x18] sm:$0xff]
      %v547 = vld [vmem:[%s319 + $0x20] sm:$0xff]
      %v548 = vld [vmem:[%s319 + $0x30] sm:$0xff]
      %v549 = vld [vmem:[%s319 + $0x38] sm:$0xff]
      %v550 = vld [vmem:[%s319 + $0x48] sm:$0xff]
      %v551 = vld [vmem:[%s319 + $0x50] sm:$0xff]
      %v552 = vld [vmem:[%s319 + $0x60] sm:$0xff]
      %v553 = vld [vmem:[%s319 + $0x68] sm:$0xff]
      %v554 = vld [vmem:[%s319 + $0x78] sm:$0xff]
      %v555 = vld [vmem:[%s319 + $0x80] sm:$0xff]
      %v556 = vld [vmem:[%s319 + $0x90] sm:$0xff]
      %v557 = vld [vmem:[%s319 + $0x98] sm:$0xff]
      %v558 = vld [vmem:[%s319 + $0xa8] sm:$0xff]
      %v559 = vld [vmem:[%s319 + $0xb0] sm:$0xff]
      %v560 = vld [vmem:[%s319 + $0xc0] sm:$0xff]
      %v561 = vld [vmem:[%s319 + $0xc8] sm:$0xff]
      %v562 = vld [vmem:[%s319 + $0xd8] sm:$0xff]
      %v563 = vld [vmem:[%s319 + $0xe0] sm:$0xff]
      %v564 = vld [vmem:[%s319 + $0xf0] sm:$0xff]
      %v565 = vld [vmem:[%s319 + $0xf8] sm:$0xff]
      %v566 = vld [vmem:[%s319 + $0x108] sm:$0xff]
      %v567 = vld [vmem:[%s319 + $0x110] sm:$0xff]
      %v568 = vld [vmem:[%s319 + $0x120] sm:$0xff]
      %v569 = vld [vmem:[%s319 + $0x128] sm:$0xff]
      %v570 = vld [vmem:[%s319 + $0x138] sm:$0xff]
      %v571 = vld [vmem:[%s319 + $0x140] sm:$0xff]
      %v572 = vld [vmem:[%s319 + $0x150] sm:$0xff]
      %v573 = vld [vmem:[%s319 + $0x158] sm:$0xff]
      %v574 = vld [vmem:[%s319 + $0x168] sm:$0xff]
      %v575 = vld [vmem:[%s319 + $0x170] sm:$0xff]
      %v576 = vld [vmem:[%s319 + $0x1] sm:$0xff]
      %v577 = vld [vmem:[%s319 + $0x9] sm:$0xff]
      %v578 = vld [vmem:[%s319 + $0x19] sm:$0xff]
      %v579 = vld [vmem:[%s319 + $0x21] sm:$0xff]
      %v580 = vld [vmem:[%s319 + $0x31] sm:$0xff]
      %v581 = vld [vmem:[%s319 + $0x39] sm:$0xff]
      %v582 = vld [vmem:[%s319 + $0x49] sm:$0xff]
      %v583 = vld [vmem:[%s319 + $0x51] sm:$0xff]
      %v584 = vld [vmem:[%s319 + $0x61] sm:$0xff]
      %v585 = vld [vmem:[%s319 + $0x69] sm:$0xff]
      %v586 = vld [vmem:[%s319 + $0x79] sm:$0xff]
      %v587 = vld [vmem:[%s319 + $0x81] sm:$0xff]
      %v588 = vld [vmem:[%s319 + $0x91] sm:$0xff]
      %v589 = vld [vmem:[%s319 + $0x99] sm:$0xff]
      %v590 = vld [vmem:[%s319 + $0xa9] sm:$0xff]
      %v591 = vld [vmem:[%s319 + $0xb1] sm:$0xff]
      %v592 = vld [vmem:[%s319 + $0xc1] sm:$0xff]
      %v593 = vld [vmem:[%s319 + $0xc9] sm:$0xff]
      %v594 = vld [vmem:[%s319 + $0xd9] sm:$0xff]
      %v595 = vld [vmem:[%s319 + $0xe1] sm:$0xff]
      %v596 = vld [vmem:[%s319 + $0xf1] sm:$0xff]
      %v597 = vld [vmem:[%s319 + $0xf9] sm:$0xff]
      %v598 = vld [vmem:[%s319 + $0x109] sm:$0xff]
      %v599 = vld [vmem:[%s319 + $0x111] sm:$0xff]
      %v600 = vld [vmem:[%s319 + $0x121] sm:$0xff]
      %v601 = vld [vmem:[%s319 + $0x129] sm:$0xff]
      %v602 = vld [vmem:[%s319 + $0x139] sm:$0xff]
      %v603 = vld [vmem:[%s319 + $0x141] sm:$0xff]
      %v604 = vld [vmem:[%s319 + $0x151] sm:$0xff]
      %v605 = vld [vmem:[%s319 + $0x159] sm:$0xff]
      %v606 = vld [vmem:[%s319 + $0x169] sm:$0xff]
      %v607 = vld [vmem:[%s319 + $0x171] sm:$0xff]
      %v608 = vld [vmem:[%s319 + $0x2] sm:$0xff]
      %v609 = vld [vmem:[%s319 + $0xa] sm:$0xff]
      %v610 = vld [vmem:[%s319 + $0x1a] sm:$0xff]
      %v611 = vld [vmem:[%s319 + $0x22] sm:$0xff]
      %v612 = vld [vmem:[%s319 + $0x32] sm:$0xff]
      %v613 = vld [vmem:[%s319 + $0x3a] sm:$0xff]
      %v614 = vld [vmem:[%s319 + $0x4a] sm:$0xff]
      %v615 = vld [vmem:[%s319 + $0x52] sm:$0xff]
      %v616 = vld [vmem:[%s319 + $0x62] sm:$0xff]
      %v617 = vld [vmem:[%s319 + $0x6a] sm:$0xff]
      %v618 = vld [vmem:[%s319 + $0x7a] sm:$0xff]
      %v619 = vld [vmem:[%s319 + $0x82] sm:$0xff]
      %v620 = vld [vmem:[%s319 + $0x92] sm:$0xff]
      %v621 = vld [vmem:[%s319 + $0x9a] sm:$0xff]
      %v622 = vld [vmem:[%s319 + $0xaa] sm:$0xff]
      %v623 = vld [vmem:[%s319 + $0xb2] sm:$0xff]
      %v624 = vld [vmem:[%s319 + $0xc2] sm:$0xff]
      %v625 = vld [vmem:[%s319 + $0xca] sm:$0xff]
      %v626 = vld [vmem:[%s319 + $0xda] sm:$0xff]
      %v627 = vld [vmem:[%s319 + $0xe2] sm:$0xff]
      %v628 = vld [vmem:[%s319 + $0xf2] sm:$0xff]
      %v629 = vld [vmem:[%s319 + $0xfa] sm:$0xff]
      %v630 = vld [vmem:[%s319 + $0x10a] sm:$0xff]
      %v631 = vld [vmem:[%s319 + $0x112] sm:$0xff]
      %v632 = vld [vmem:[%s319 + $0x122] sm:$0xff]
      %v633 = vld [vmem:[%s319 + $0x12a] sm:$0xff]
      %v634 = vld [vmem:[%s319 + $0x13a] sm:$0xff]
      %v635 = vld [vmem:[%s319 + $0x142] sm:$0xff]
      %v636 = vld [vmem:[%s319 + $0x152] sm:$0xff]
      %v637 = vld [vmem:[%s319 + $0x15a] sm:$0xff]
      %v638 = vld [vmem:[%s319 + $0x16a] sm:$0xff]
      %v639 = vld [vmem:[%s319 + $0x172] sm:$0xff]
      %s640 = scalar_lea.vmem [#allocation2], 48
      %v641 = vld [vmem:[%s640] sm:$0xff]
      %v642 = vld [vmem:[%s640 + $0x8] sm:$0xff]
      %v643 = vld [vmem:[%s640 + $0x18] sm:$0xff]
      %v644 = vld [vmem:[%s640 + $0x20] sm:$0xff]
      %v645 = vld [vmem:[%s640 + $0x30] sm:$0xff]
      %v646 = vld [vmem:[%s640 + $0x38] sm:$0xff]
      %v647 = vld [vmem:[%s640 + $0x48] sm:$0xff]
      %v648 = vld [vmem:[%s640 + $0x50] sm:$0xff]
      %v649 = vld [vmem:[%s640 + $0x60] sm:$0xff]
      %v650 = vld [vmem:[%s640 + $0x68] sm:$0xff]
      %v651 = vld [vmem:[%s640 + $0x78] sm:$0xff]
      %v652 = vld [vmem:[%s640 + $0x80] sm:$0xff]
      %v653 = vld [vmem:[%s640 + $0x90] sm:$0xff]
      %v654 = vld [vmem:[%s640 + $0x98] sm:$0xff]
      %v655 = vld [vmem:[%s640 + $0xa8] sm:$0xff]
      %v656 = vld [vmem:[%s640 + $0xb0] sm:$0xff]
      %v657 = vld [vmem:[%s640 + $0xc0] sm:$0xff]
      %v658 = vld [vmem:[%s640 + $0xc8] sm:$0xff]
      %v659 = vld [vmem:[%s640 + $0xd8] sm:$0xff]
      %v660 = vld [vmem:[%s640 + $0xe0] sm:$0xff]
      %v661 = vld [vmem:[%s640 + $0xf0] sm:$0xff]
      %v662 = vld [vmem:[%s640 + $0xf8] sm:$0xff]
      %v663 = vld [vmem:[%s640 + $0x108] sm:$0xff]
      %v664 = vld [vmem:[%s640 + $0x110] sm:$0xff]
      %v665 = vld [vmem:[%s640 + $0x120] sm:$0xff]
      %v666 = vld [vmem:[%s640 + $0x128] sm:$0xff]
      %v667 = vld [vmem:[%s640 + $0x138] sm:$0xff]
      %v668 = vld [vmem:[%s640 + $0x140] sm:$0xff]
      %v669 = vld [vmem:[%s640 + $0x150] sm:$0xff]
      %v670 = vld [vmem:[%s640 + $0x158] sm:$0xff]
      %v671 = vld [vmem:[%s640 + $0x168] sm:$0xff]
      %v672 = vld [vmem:[%s640 + $0x170] sm:$0xff]
      %v673 = vld [vmem:[%s640 + $0x1] sm:$0xff]
      %v674 = vld [vmem:[%s640 + $0x9] sm:$0xff]
      %v675 = vld [vmem:[%s640 + $0x19] sm:$0xff]
      %v676 = vld [vmem:[%s640 + $0x21] sm:$0xff]
      %v677 = vld [vmem:[%s640 + $0x31] sm:$0xff]
      %v678 = vld [vmem:[%s640 + $0x39] sm:$0xff]
      %v679 = vld [vmem:[%s640 + $0x49] sm:$0xff]
      %v680 = vld [vmem:[%s640 + $0x51] sm:$0xff]
      %v681 = vld [vmem:[%s640 + $0x61] sm:$0xff]
      %v682 = vld [vmem:[%s640 + $0x69] sm:$0xff]
      %v683 = vld [vmem:[%s640 + $0x79] sm:$0xff]
      %v684 = vld [vmem:[%s640 + $0x81] sm:$0xff]
      %v685 = vld [vmem:[%s640 + $0x91] sm:$0xff]
      %v686 = vld [vmem:[%s640 + $0x99] sm:$0xff]
      %v687 = vld [vmem:[%s640 + $0xa9] sm:$0xff]
      %v688 = vld [vmem:[%s640 + $0xb1] sm:$0xff]
      %v689 = vld [vmem:[%s640 + $0xc1] sm:$0xff]
      %v690 = vld [vmem:[%s640 + $0xc9] sm:$0xff]
      %v691 = vld [vmem:[%s640 + $0xd9] sm:$0xff]
      %v692 = vld [vmem:[%s640 + $0xe1] sm:$0xff]
      %v693 = vld [vmem:[%s640 + $0xf1] sm:$0xff]
      %v694 = vld [vmem:[%s640 + $0xf9] sm:$0xff]
      %v695 = vld [vmem:[%s640 + $0x109] sm:$0xff]
      %v696 = vld [vmem:[%s640 + $0x111] sm:$0xff]
      %v697 = vld [vmem:[%s640 + $0x121] sm:$0xff]
      %v698 = vld [vmem:[%s640 + $0x129] sm:$0xff]
      %v699 = vld [vmem:[%s640 + $0x139] sm:$0xff]
      %v700 = vld [vmem:[%s640 + $0x141] sm:$0xff]
      %v701 = vld [vmem:[%s640 + $0x151] sm:$0xff]
      %v702 = vld [vmem:[%s640 + $0x159] sm:$0xff]
      %v703 = vld [vmem:[%s640 + $0x169] sm:$0xff]
      %v704 = vld [vmem:[%s640 + $0x171] sm:$0xff]
      %v705 = vld [vmem:[%s640 + $0x2] sm:$0xff]
      %v706 = vld [vmem:[%s640 + $0xa] sm:$0xff]
      %v707 = vld [vmem:[%s640 + $0x1a] sm:$0xff]
      %v708 = vld [vmem:[%s640 + $0x22] sm:$0xff]
      %v709 = vld [vmem:[%s640 + $0x32] sm:$0xff]
      %v710 = vld [vmem:[%s640 + $0x3a] sm:$0xff]
      %v711 = vld [vmem:[%s640 + $0x4a] sm:$0xff]
      %v712 = vld [vmem:[%s640 + $0x52] sm:$0xff]
      %v713 = vld [vmem:[%s640 + $0x62] sm:$0xff]
      %v714 = vld [vmem:[%s640 + $0x6a] sm:$0xff]
      %v715 = vld [vmem:[%s640 + $0x7a] sm:$0xff]
      %v716 = vld [vmem:[%s640 + $0x82] sm:$0xff]
      %v717 = vld [vmem:[%s640 + $0x92] sm:$0xff]
      %v718 = vld [vmem:[%s640 + $0x9a] sm:$0xff]
      %v719 = vld [vmem:[%s640 + $0xaa] sm:$0xff]
      %v720 = vld [vmem:[%s640 + $0xb2] sm:$0xff]
      %v721 = vld [vmem:[%s640 + $0xc2] sm:$0xff]
      %v722 = vld [vmem:[%s640 + $0xca] sm:$0xff]
      %v723 = vld [vmem:[%s640 + $0xda] sm:$0xff]
      %v724 = vld [vmem:[%s640 + $0xe2] sm:$0xff]
      %v725 = vld [vmem:[%s640 + $0xf2] sm:$0xff]
      %v726 = vld [vmem:[%s640 + $0xfa] sm:$0xff]
      %v727 = vld [vmem:[%s640 + $0x10a] sm:$0xff]
      %v728 = vld [vmem:[%s640 + $0x112] sm:$0xff]
      %v729 = vld [vmem:[%s640 + $0x122] sm:$0xff]
      %v730 = vld [vmem:[%s640 + $0x12a] sm:$0xff]
      %v731 = vld [vmem:[%s640 + $0x13a] sm:$0xff]
      %v732 = vld [vmem:[%s640 + $0x142] sm:$0xff]
      %v733 = vld [vmem:[%s640 + $0x152] sm:$0xff]
      %v734 = vld [vmem:[%s640 + $0x15a] sm:$0xff]
      %v735 = vld [vmem:[%s640 + $0x16a] sm:$0xff]
      %v736 = vld [vmem:[%s640 + $0x172] sm:$0xff]
      %769 = vrot.lane.b32.xlu0 %v480, 4
      %v770 = vpop.permute.xlu0 %769
      %771 = vrot.lane.b32.xlu0 %v481, 4
      %v772 = vpop.permute.xlu0 %771
      %773 = vrot.lane.b32.xlu0 %v482, 4
      %v774 = vpop.permute.xlu0 %773
      %775 = vrot.lane.b32.xlu0 %v483, 4
      %v776 = vpop.permute.xlu0 %775
      %777 = vrot.lane.b32.xlu0 %v484, 4
      %v778 = vpop.permute.xlu0 %777
      %779 = vrot.lane.b32.xlu0 %v485, 4
      %v780 = vpop.permute.xlu0 %779
      %781 = vrot.lane.b32.xlu0 %v486, 4
      %v782 = vpop.permute.xlu0 %781
      %783 = vrot.lane.b32.xlu0 %v487, 4
      %v784 = vpop.permute.xlu0 %783
      %785 = vrot.lane.b32.xlu0 %v488, 4
      %v786 = vpop.permute.xlu0 %785
      %787 = vrot.lane.b32.xlu0 %v489, 4
      %v788 = vpop.permute.xlu0 %787
      %789 = vrot.lane.b32.xlu0 %v490, 4
      %v790 = vpop.permute.xlu0 %789
      %791 = vrot.lane.b32.xlu0 %v491, 4
      %v792 = vpop.permute.xlu0 %791
      %793 = vrot.lane.b32.xlu0 %v492, 4
      %v794 = vpop.permute.xlu0 %793
      %795 = vrot.lane.b32.xlu0 %v493, 4
      %v796 = vpop.permute.xlu0 %795
      %797 = vrot.lane.b32.xlu0 %v494, 4
      %v798 = vpop.permute.xlu0 %797
      %799 = vrot.lane.b32.xlu0 %v495, 4
      %v800 = vpop.permute.xlu0 %799
      %801 = vrot.lane.b32.xlu0 %v496, 4
      %v802 = vpop.permute.xlu0 %801
      %803 = vrot.lane.b32.xlu0 %v497, 4
      %v804 = vpop.permute.xlu0 %803
      %805 = vrot.lane.b32.xlu0 %v498, 4
      %v806 = vpop.permute.xlu0 %805
      %807 = vrot.lane.b32.xlu0 %v499, 4
      %v808 = vpop.permute.xlu0 %807
      %809 = vrot.lane.b32.xlu0 %v500, 4
      %v810 = vpop.permute.xlu0 %809
      %811 = vrot.lane.b32.xlu0 %v501, 4
      %v812 = vpop.permute.xlu0 %811
      %813 = vrot.lane.b32.xlu0 %v502, 4
      %v814 = vpop.permute.xlu0 %813
      %815 = vrot.lane.b32.xlu0 %v503, 4
      %v816 = vpop.permute.xlu0 %815
      %817 = vrot.lane.b32.xlu0 %v504, 4
      %v818 = vpop.permute.xlu0 %817
      %819 = vrot.lane.b32.xlu0 %v505, 4
      %v820 = vpop.permute.xlu0 %819
      %821 = vrot.lane.b32.xlu0 %v506, 4
      %v822 = vpop.permute.xlu0 %821
      %823 = vrot.lane.b32.xlu0 %v507, 4
      %v824 = vpop.permute.xlu0 %823
      %825 = vrot.lane.b32.xlu0 %v508, 4
      %v826 = vpop.permute.xlu0 %825
      %827 = vrot.lane.b32.xlu0 %v509, 4
      %v828 = vpop.permute.xlu0 %827
      %829 = vrot.lane.b32.xlu0 %v510, 4
      %v830 = vpop.permute.xlu0 %829
      %831 = vrot.lane.b32.xlu0 %v511, 4
      %v832 = vpop.permute.xlu0 %831
      %897 = vrot.lane.b32.xlu0 %v512, 8
      %v898 = vpop.permute.xlu0 %897
      %899 = vrot.lane.b32.xlu0 %v513, 8
      %v900 = vpop.permute.xlu0 %899
      %901 = vrot.lane.b32.xlu0 %v514, 8
      %v902 = vpop.permute.xlu0 %901
      %903 = vrot.lane.b32.xlu0 %v515, 8
      %v904 = vpop.permute.xlu0 %903
      %905 = vrot.lane.b32.xlu0 %v516, 8
      %v906 = vpop.permute.xlu0 %905
      %907 = vrot.lane.b32.xlu0 %v517, 8
      %v908 = vpop.permute.xlu0 %907
      %909 = vrot.lane.b32.xlu0 %v518, 8
      %v910 = vpop.permute.xlu0 %909
      %911 = vrot.lane.b32.xlu0 %v519, 8
      %v912 = vpop.permute.xlu0 %911
      %913 = vrot.lane.b32.xlu0 %v520, 8
      %v914 = vpop.permute.xlu0 %913
      %915 = vrot.lane.b32.xlu0 %v521, 8
      %v916 = vpop.permute.xlu0 %915
      %917 = vrot.lane.b32.xlu0 %v522, 8
      %v918 = vpop.permute.xlu0 %917
      %919 = vrot.lane.b32.xlu0 %v523, 8
      %v920 = vpop.permute.xlu0 %919
      %921 = vrot.lane.b32.xlu0 %v524, 8
      %v922 = vpop.permute.xlu0 %921
      %923 = vrot.lane.b32.xlu0 %v525, 8
      %v924 = vpop.permute.xlu0 %923
      %925 = vrot.lane.b32.xlu0 %v526, 8
      %v926 = vpop.permute.xlu0 %925
      %927 = vrot.lane.b32.xlu0 %v527, 8
      %v928 = vpop.permute.xlu0 %927
      %929 = vrot.lane.b32.xlu0 %v528, 8
      %v930 = vpop.permute.xlu0 %929
      %931 = vrot.lane.b32.xlu0 %v529, 8
      %v932 = vpop.permute.xlu0 %931
      %933 = vrot.lane.b32.xlu0 %v530, 8
      %v934 = vpop.permute.xlu0 %933
      %935 = vrot.lane.b32.xlu0 %v531, 8
      %v936 = vpop.permute.xlu0 %935
      %937 = vrot.lane.b32.xlu0 %v532, 8
      %v938 = vpop.permute.xlu0 %937
      %939 = vrot.lane.b32.xlu0 %v533, 8
      %v940 = vpop.permute.xlu0 %939
      %941 = vrot.lane.b32.xlu0 %v534, 8
      %v942 = vpop.permute.xlu0 %941
      %943 = vrot.lane.b32.xlu0 %v535, 8
      %v944 = vpop.permute.xlu0 %943
      %945 = vrot.lane.b32.xlu0 %v536, 8
      %v946 = vpop.permute.xlu0 %945
      %947 = vrot.lane.b32.xlu0 %v537, 8
      %v948 = vpop.permute.xlu0 %947
      %949 = vrot.lane.b32.xlu0 %v538, 8
      %v950 = vpop.permute.xlu0 %949
      %951 = vrot.lane.b32.xlu0 %v539, 8
      %v952 = vpop.permute.xlu0 %951
      %953 = vrot.lane.b32.xlu0 %v540, 8
      %v954 = vpop.permute.xlu0 %953
      %955 = vrot.lane.b32.xlu0 %v541, 8
      %v956 = vpop.permute.xlu0 %955
      %957 = vrot.lane.b32.xlu0 %v542, 8
      %v958 = vpop.permute.xlu0 %957
      %959 = vrot.lane.b32.xlu0 %v543, 8
      %v960 = vpop.permute.xlu0 %959
      %1025 = vrot.lane.b32.xlu0 %v544, 12
      %v1026 = vpop.permute.xlu0 %1025
      %1027 = vrot.lane.b32.xlu0 %v545, 12
      %v1028 = vpop.permute.xlu0 %1027
      %1029 = vrot.lane.b32.xlu0 %v546, 12
      %v1030 = vpop.permute.xlu0 %1029
      %1031 = vrot.lane.b32.xlu0 %v547, 12
      %v1032 = vpop.permute.xlu0 %1031
      %1033 = vrot.lane.b32.xlu0 %v548, 12
      %v1034 = vpop.permute.xlu0 %1033
      %1035 = vrot.lane.b32.xlu0 %v549, 12
      %v1036 = vpop.permute.xlu0 %1035
      %1037 = vrot.lane.b32.xlu0 %v550, 12
      %v1038 = vpop.permute.xlu0 %1037
      %1039 = vrot.lane.b32.xlu0 %v551, 12
      %v1040 = vpop.permute.xlu0 %1039
      %1041 = vrot.lane.b32.xlu0 %v552, 12
      %v1042 = vpop.permute.xlu0 %1041
      %1043 = vrot.lane.b32.xlu0 %v553, 12
      %v1044 = vpop.permute.xlu0 %1043
      %1045 = vrot.lane.b32.xlu0 %v554, 12
      %v1046 = vpop.permute.xlu0 %1045
      %1047 = vrot.lane.b32.xlu0 %v555, 12
      %v1048 = vpop.permute.xlu0 %1047
      %1049 = vrot.lane.b32.xlu0 %v556, 12
      %v1050 = vpop.permute.xlu0 %1049
      %1051 = vrot.lane.b32.xlu0 %v557, 12
      %v1052 = vpop.permute.xlu0 %1051
      %1053 = vrot.lane.b32.xlu0 %v558, 12
      %v1054 = vpop.permute.xlu0 %1053
      %1055 = vrot.lane.b32.xlu0 %v559, 12
      %v1056 = vpop.permute.xlu0 %1055
      %1057 = vrot.lane.b32.xlu0 %v560, 12
      %v1058 = vpop.permute.xlu0 %1057
      %1059 = vrot.lane.b32.xlu0 %v561, 12
      %v1060 = vpop.permute.xlu0 %1059
      %1061 = vrot.lane.b32.xlu0 %v562, 12
      %v1062 = vpop.permute.xlu0 %1061
      %1063 = vrot.lane.b32.xlu0 %v563, 12
      %v1064 = vpop.permute.xlu0 %1063
      %1065 = vrot.lane.b32.xlu0 %v564, 12
      %v1066 = vpop.permute.xlu0 %1065
      %1067 = vrot.lane.b32.xlu0 %v565, 12
      %v1068 = vpop.permute.xlu0 %1067
      %1069 = vrot.lane.b32.xlu0 %v566, 12
      %v1070 = vpop.permute.xlu0 %1069
      %1071 = vrot.lane.b32.xlu0 %v567, 12
      %v1072 = vpop.permute.xlu0 %1071
      %1073 = vrot.lane.b32.xlu0 %v568, 12
      %v1074 = vpop.permute.xlu0 %1073
      %1075 = vrot.lane.b32.xlu0 %v569, 12
      %v1076 = vpop.permute.xlu0 %1075
      %1077 = vrot.lane.b32.xlu0 %v570, 12
      %v1078 = vpop.permute.xlu0 %1077
      %1079 = vrot.lane.b32.xlu0 %v571, 12
      %v1080 = vpop.permute.xlu0 %1079
      %1081 = vrot.lane.b32.xlu0 %v572, 12
      %v1082 = vpop.permute.xlu0 %1081
      %1083 = vrot.lane.b32.xlu0 %v573, 12
      %v1084 = vpop.permute.xlu0 %1083
      %1085 = vrot.lane.b32.xlu0 %v574, 12
      %v1086 = vpop.permute.xlu0 %1085
      %1087 = vrot.lane.b32.xlu0 %v575, 12
      %v1088 = vpop.permute.xlu0 %1087
      %1153 = vrot.lane.b32.xlu0 %v576, 16
      %v1154 = vpop.permute.xlu0 %1153
      %1155 = vrot.lane.b32.xlu0 %v577, 16
      %v1156 = vpop.permute.xlu0 %1155
      %1157 = vrot.lane.b32.xlu0 %v578, 16
      %v1158 = vpop.permute.xlu0 %1157
      %1159 = vrot.lane.b32.xlu0 %v579, 16
      %v1160 = vpop.permute.xlu0 %1159
      %1161 = vrot.lane.b32.xlu0 %v580, 16
      %v1162 = vpop.permute.xlu0 %1161
      %1163 = vrot.lane.b32.xlu0 %v581, 16
      %v1164 = vpop.permute.xlu0 %1163
      %1165 = vrot.lane.b32.xlu0 %v582, 16
      %v1166 = vpop.permute.xlu0 %1165
      %1167 = vrot.lane.b32.xlu0 %v583, 16
      %v1168 = vpop.permute.xlu0 %1167
      %1169 = vrot.lane.b32.xlu0 %v584, 16
      %v1170 = vpop.permute.xlu0 %1169
      %1171 = vrot.lane.b32.xlu0 %v585, 16
      %v1172 = vpop.permute.xlu0 %1171
      %1173 = vrot.lane.b32.xlu0 %v586, 16
      %v1174 = vpop.permute.xlu0 %1173
      %1175 = vrot.lane.b32.xlu0 %v587, 16
      %v1176 = vpop.permute.xlu0 %1175
      %1177 = vrot.lane.b32.xlu0 %v588, 16
      %v1178 = vpop.permute.xlu0 %1177
      %1179 = vrot.lane.b32.xlu0 %v589, 16
      %v1180 = vpop.permute.xlu0 %1179
      %1181 = vrot.lane.b32.xlu0 %v590, 16
      %v1182 = vpop.permute.xlu0 %1181
      %1183 = vrot.lane.b32.xlu0 %v591, 16
      %v1184 = vpop.permute.xlu0 %1183
      %1185 = vrot.lane.b32.xlu0 %v592, 16
      %v1186 = vpop.permute.xlu0 %1185
      %1187 = vrot.lane.b32.xlu0 %v593, 16
      %v1188 = vpop.permute.xlu0 %1187
      %1189 = vrot.lane.b32.xlu0 %v594, 16
      %v1190 = vpop.permute.xlu0 %1189
      %1191 = vrot.lane.b32.xlu0 %v595, 16
      %v1192 = vpop.permute.xlu0 %1191
      %1193 = vrot.lane.b32.xlu0 %v596, 16
      %v1194 = vpop.permute.xlu0 %1193
      %1195 = vrot.lane.b32.xlu0 %v597, 16
      %v1196 = vpop.permute.xlu0 %1195
      %1197 = vrot.lane.b32.xlu0 %v598, 16
      %v1198 = vpop.permute.xlu0 %1197
      %1199 = vrot.lane.b32.xlu0 %v599, 16
      %v1200 = vpop.permute.xlu0 %1199
      %1201 = vrot.lane.b32.xlu0 %v600, 16
      %v1202 = vpop.permute.xlu0 %1201
      %1203 = vrot.lane.b32.xlu0 %v601, 16
      %v1204 = vpop.permute.xlu0 %1203
      %1205 = vrot.lane.b32.xlu0 %v602, 16
      %v1206 = vpop.permute.xlu0 %1205
      %1207 = vrot.lane.b32.xlu0 %v603, 16
      %v1208 = vpop.permute.xlu0 %1207
      %1209 = vrot.lane.b32.xlu0 %v604, 16
      %v1210 = vpop.permute.xlu0 %1209
      %1211 = vrot.lane.b32.xlu0 %v605, 16
      %v1212 = vpop.permute.xlu0 %1211
      %1213 = vrot.lane.b32.xlu0 %v606, 16
      %v1214 = vpop.permute.xlu0 %1213
      %1215 = vrot.lane.b32.xlu0 %v607, 16
      %v1216 = vpop.permute.xlu0 %1215
      %1281 = vrot.lane.b32.xlu0 %v608, 20
      %v1282 = vpop.permute.xlu0 %1281
      %1283 = vrot.lane.b32.xlu0 %v609, 20
      %v1284 = vpop.permute.xlu0 %1283
      %1285 = vrot.lane.b32.xlu0 %v610, 20
      %v1286 = vpop.permute.xlu0 %1285
      %1287 = vrot.lane.b32.xlu0 %v611, 20
      %v1288 = vpop.permute.xlu0 %1287
      %1289 = vrot.lane.b32.xlu0 %v612, 20
      %v1290 = vpop.permute.xlu0 %1289
      %1291 = vrot.lane.b32.xlu0 %v613, 20
      %v1292 = vpop.permute.xlu0 %1291
      %1293 = vrot.lane.b32.xlu0 %v614, 20
      %v1294 = vpop.permute.xlu0 %1293
      %1295 = vrot.lane.b32.xlu0 %v615, 20
      %v1296 = vpop.permute.xlu0 %1295
      %1297 = vrot.lane.b32.xlu0 %v616, 20
      %v1298 = vpop.permute.xlu0 %1297
      %1299 = vrot.lane.b32.xlu0 %v617, 20
      %v1300 = vpop.permute.xlu0 %1299
      %1301 = vrot.lane.b32.xlu0 %v618, 20
      %v1302 = vpop.permute.xlu0 %1301
      %1303 = vrot.lane.b32.xlu0 %v619, 20
      %v1304 = vpop.permute.xlu0 %1303
      %1305 = vrot.lane.b32.xlu0 %v620, 20
      %v1306 = vpop.permute.xlu0 %1305
      %1307 = vrot.lane.b32.xlu0 %v621, 20
      %v1308 = vpop.permute.xlu0 %1307
      %1309 = vrot.lane.b32.xlu0 %v622, 20
      %v1310 = vpop.permute.xlu0 %1309
      %1311 = vrot.lane.b32.xlu0 %v623, 20
      %v1312 = vpop.permute.xlu0 %1311
      %1313 = vrot.lane.b32.xlu0 %v624, 20
      %v1314 = vpop.permute.xlu0 %1313
      %1315 = vrot.lane.b32.xlu0 %v625, 20
      %v1316 = vpop.permute.xlu0 %1315
      %1317 = vrot.lane.b32.xlu0 %v626, 20
      %v1318 = vpop.permute.xlu0 %1317
      %1319 = vrot.lane.b32.xlu0 %v627, 20
      %v1320 = vpop.permute.xlu0 %1319
      %1321 = vrot.lane.b32.xlu0 %v628, 20
      %v1322 = vpop.permute.xlu0 %1321
      %1323 = vrot.lane.b32.xlu0 %v629, 20
      %v1324 = vpop.permute.xlu0 %1323
      %1325 = vrot.lane.b32.xlu0 %v630, 20
      %v1326 = vpop.permute.xlu0 %1325
      %1327 = vrot.lane.b32.xlu0 %v631, 20
      %v1328 = vpop.permute.xlu0 %1327
      %1329 = vrot.lane.b32.xlu0 %v632, 20
      %v1330 = vpop.permute.xlu0 %1329
      %1331 = vrot.lane.b32.xlu0 %v633, 20
      %v1332 = vpop.permute.xlu0 %1331
      %1333 = vrot.lane.b32.xlu0 %v634, 20
      %v1334 = vpop.permute.xlu0 %1333
      %1335 = vrot.lane.b32.xlu0 %v635, 20
      %v1336 = vpop.permute.xlu0 %1335
      %1337 = vrot.lane.b32.xlu0 %v636, 20
      %v1338 = vpop.permute.xlu0 %1337
      %1339 = vrot.lane.b32.xlu0 %v637, 20
      %v1340 = vpop.permute.xlu0 %1339
      %1341 = vrot.lane.b32.xlu0 %v638, 20
      %v1342 = vpop.permute.xlu0 %1341
      %1343 = vrot.lane.b32.xlu0 %v639, 20
      %v1344 = vpop.permute.xlu0 %1343
      %1409 = vrot.lane.b32.xlu0 %v641, 24
      %v1410 = vpop.permute.xlu0 %1409
      %1411 = vrot.lane.b32.xlu0 %v642, 24
      %v1412 = vpop.permute.xlu0 %1411
      %1413 = vrot.lane.b32.xlu0 %v643, 24
      %v1414 = vpop.permute.xlu0 %1413
      %1415 = vrot.lane.b32.xlu0 %v644, 24
      %v1416 = vpop.permute.xlu0 %1415
      %1417 = vrot.lane.b32.xlu0 %v645, 24
      %v1418 = vpop.permute.xlu0 %1417
      %1419 = vrot.lane.b32.xlu0 %v646, 24
      %v1420 = vpop.permute.xlu0 %1419
      %1421 = vrot.lane.b32.xlu0 %v647, 24
      %v1422 = vpop.permute.xlu0 %1421
      %1423 = vrot.lane.b32.xlu0 %v648, 24
      %v1424 = vpop.permute.xlu0 %1423
      %1425 = vrot.lane.b32.xlu0 %v649, 24
      %v1426 = vpop.permute.xlu0 %1425
      %1427 = vrot.lane.b32.xlu0 %v650, 24
      %v1428 = vpop.permute.xlu0 %1427
      %1429 = vrot.lane.b32.xlu0 %v651, 24
      %v1430 = vpop.permute.xlu0 %1429
      %1431 = vrot.lane.b32.xlu0 %v652, 24
      %v1432 = vpop.permute.xlu0 %1431
      %1433 = vrot.lane.b32.xlu0 %v653, 24
      %v1434 = vpop.permute.xlu0 %1433
      %1435 = vrot.lane.b32.xlu0 %v654, 24
      %v1436 = vpop.permute.xlu0 %1435
      %1437 = vrot.lane.b32.xlu0 %v655, 24
      %v1438 = vpop.permute.xlu0 %1437
      %1439 = vrot.lane.b32.xlu0 %v656, 24
      %v1440 = vpop.permute.xlu0 %1439
      %1441 = vrot.lane.b32.xlu0 %v657, 24
      %v1442 = vpop.permute.xlu0 %1441
      %1443 = vrot.lane.b32.xlu0 %v658, 24
      %v1444 = vpop.permute.xlu0 %1443
      %1445 = vrot.lane.b32.xlu0 %v659, 24
      %v1446 = vpop.permute.xlu0 %1445
      %1447 = vrot.lane.b32.xlu0 %v660, 24
      %v1448 = vpop.permute.xlu0 %1447
      %1449 = vrot.lane.b32.xlu0 %v661, 24
      %v1450 = vpop.permute.xlu0 %1449
      %1451 = vrot.lane.b32.xlu0 %v662, 24
      %v1452 = vpop.permute.xlu0 %1451
      %1453 = vrot.lane.b32.xlu0 %v663, 24
      %v1454 = vpop.permute.xlu0 %1453
      %1455 = vrot.lane.b32.xlu0 %v664, 24
      %v1456 = vpop.permute.xlu0 %1455
      %1457 = vrot.lane.b32.xlu0 %v665, 24
      %v1458 = vpop.permute.xlu0 %1457
      %1459 = vrot.lane.b32.xlu0 %v666, 24
      %v1460 = vpop.permute.xlu0 %1459
      %1461 = vrot.lane.b32.xlu0 %v667, 24
      %v1462 = vpop.permute.xlu0 %1461
      %1463 = vrot.lane.b32.xlu0 %v668, 24
      %v1464 = vpop.permute.xlu0 %1463
      %1465 = vrot.lane.b32.xlu0 %v669, 24
      %v1466 = vpop.permute.xlu0 %1465
      %1467 = vrot.lane.b32.xlu0 %v670, 24
      %v1468 = vpop.permute.xlu0 %1467
      %1469 = vrot.lane.b32.xlu0 %v671, 24
      %v1470 = vpop.permute.xlu0 %1469
      %1471 = vrot.lane.b32.xlu0 %v672, 24
      %v1472 = vpop.permute.xlu0 %1471
      %1537 = vrot.lane.b32.xlu0 %v673, 28
      %v1538 = vpop.permute.xlu0 %1537
      %1539 = vrot.lane.b32.xlu0 %v674, 28
      %v1540 = vpop.permute.xlu0 %1539
      %1541 = vrot.lane.b32.xlu0 %v675, 28
      %v1542 = vpop.permute.xlu0 %1541
      %1543 = vrot.lane.b32.xlu0 %v676, 28
      %v1544 = vpop.permute.xlu0 %1543
      %1545 = vrot.lane.b32.xlu0 %v677, 28
      %v1546 = vpop.permute.xlu0 %1545
      %1547 = vrot.lane.b32.xlu0 %v678, 28
      %v1548 = vpop.permute.xlu0 %1547
      %1549 = vrot.lane.b32.xlu0 %v679, 28
      %v1550 = vpop.permute.xlu0 %1549
      %1551 = vrot.lane.b32.xlu0 %v680, 28
      %v1552 = vpop.permute.xlu0 %1551
      %1553 = vrot.lane.b32.xlu0 %v681, 28
      %v1554 = vpop.permute.xlu0 %1553
      %1555 = vrot.lane.b32.xlu0 %v682, 28
      %v1556 = vpop.permute.xlu0 %1555
      %1557 = vrot.lane.b32.xlu0 %v683, 28
      %v1558 = vpop.permute.xlu0 %1557
      %1559 = vrot.lane.b32.xlu0 %v684, 28
      %v1560 = vpop.permute.xlu0 %1559
      %1561 = vrot.lane.b32.xlu0 %v685, 28
      %v1562 = vpop.permute.xlu0 %1561
      %1563 = vrot.lane.b32.xlu0 %v686, 28
      %v1564 = vpop.permute.xlu0 %1563
      %1565 = vrot.lane.b32.xlu0 %v687, 28
      %v1566 = vpop.permute.xlu0 %1565
      %1567 = vrot.lane.b32.xlu0 %v688, 28
      %v1568 = vpop.permute.xlu0 %1567
      %1569 = vrot.lane.b32.xlu0 %v689, 28
      %v1570 = vpop.permute.xlu0 %1569
      %1571 = vrot.lane.b32.xlu0 %v690, 28
      %v1572 = vpop.permute.xlu0 %1571
      %1573 = vrot.lane.b32.xlu0 %v691, 28
      %v1574 = vpop.permute.xlu0 %1573
      %1575 = vrot.lane.b32.xlu0 %v692, 28
      %v1576 = vpop.permute.xlu0 %1575
      %1577 = vrot.lane.b32.xlu0 %v693, 28
      %v1578 = vpop.permute.xlu0 %1577
      %1579 = vrot.lane.b32.xlu0 %v694, 28
      %v1580 = vpop.permute.xlu0 %1579
      %1581 = vrot.lane.b32.xlu0 %v695, 28
      %v1582 = vpop.permute.xlu0 %1581
      %1583 = vrot.lane.b32.xlu0 %v696, 28
      %v1584 = vpop.permute.xlu0 %1583
      %1585 = vrot.lane.b32.xlu0 %v697, 28
      %v1586 = vpop.permute.xlu0 %1585
      %1587 = vrot.lane.b32.xlu0 %v698, 28
      %v1588 = vpop.permute.xlu0 %1587
      %1589 = vrot.lane.b32.xlu0 %v699, 28
      %v1590 = vpop.permute.xlu0 %1589
      %1591 = vrot.lane.b32.xlu0 %v700, 28
      %v1592 = vpop.permute.xlu0 %1591
      %1593 = vrot.lane.b32.xlu0 %v701, 28
      %v1594 = vpop.permute.xlu0 %1593
      %1595 = vrot.lane.b32.xlu0 %v702, 28
      %v1596 = vpop.permute.xlu0 %1595
      %1597 = vrot.lane.b32.xlu0 %v703, 28
      %v1598 = vpop.permute.xlu0 %1597
      %1599 = vrot.lane.b32.xlu0 %v704, 28
      %v1600 = vpop.permute.xlu0 %1599
      %1665 = vrot.lane.b32.xlu0 %v705, 32
      %v1666 = vpop.permute.xlu0 %1665
      %1667 = vrot.lane.b32.xlu0 %v706, 32
      %v1668 = vpop.permute.xlu0 %1667
      %1669 = vrot.lane.b32.xlu0 %v707, 32
      %v1670 = vpop.permute.xlu0 %1669
      %1671 = vrot.lane.b32.xlu0 %v708, 32
      %v1672 = vpop.permute.xlu0 %1671
      %1673 = vrot.lane.b32.xlu0 %v709, 32
      %v1674 = vpop.permute.xlu0 %1673
      %1675 = vrot.lane.b32.xlu0 %v710, 32
      %v1676 = vpop.permute.xlu0 %1675
      %1677 = vrot.lane.b32.xlu0 %v711, 32
      %v1678 = vpop.permute.xlu0 %1677
      %1679 = vrot.lane.b32.xlu0 %v712, 32
      %v1680 = vpop.permute.xlu0 %1679
      %1681 = vrot.lane.b32.xlu0 %v713, 32
      %v1682 = vpop.permute.xlu0 %1681
      %1683 = vrot.lane.b32.xlu0 %v714, 32
      %v1684 = vpop.permute.xlu0 %1683
      %1685 = vrot.lane.b32.xlu0 %v715, 32
      %v1686 = vpop.permute.xlu0 %1685
      %1687 = vrot.lane.b32.xlu0 %v716, 32
      %v1688 = vpop.permute.xlu0 %1687
      %1689 = vrot.lane.b32.xlu0 %v717, 32
      %v1690 = vpop.permute.xlu0 %1689
      %1691 = vrot.lane.b32.xlu0 %v718, 32
      %v1692 = vpop.permute.xlu0 %1691
      %1693 = vrot.lane.b32.xlu0 %v719, 32
      %v1694 = vpop.permute.xlu0 %1693
      %1695 = vrot.lane.b32.xlu0 %v720, 32
      %v1696 = vpop.permute.xlu0 %1695
      %1697 = vrot.lane.b32.xlu0 %v721, 32
      %v1698 = vpop.permute.xlu0 %1697
      %1699 = vrot.lane.b32.xlu0 %v722, 32
      %v1700 = vpop.permute.xlu0 %1699
      %1701 = vrot.lane.b32.xlu0 %v723, 32
      %v1702 = vpop.permute.xlu0 %1701
      %1703 = vrot.lane.b32.xlu0 %v724, 32
      %v1704 = vpop.permute.xlu0 %1703
      %1705 = vrot.lane.b32.xlu0 %v725, 32
      %v1706 = vpop.permute.xlu0 %1705
      %1707 = vrot.lane.b32.xlu0 %v726, 32
      %v1708 = vpop.permute.xlu0 %1707
      %1709 = vrot.lane.b32.xlu0 %v727, 32
      %v1710 = vpop.permute.xlu0 %1709
      %1711 = vrot.lane.b32.xlu0 %v728, 32
      %v1712 = vpop.permute.xlu0 %1711
      %1713 = vrot.lane.b32.xlu0 %v729, 32
      %v1714 = vpop.permute.xlu0 %1713
      %1715 = vrot.lane.b32.xlu0 %v730, 32
      %v1716 = vpop.permute.xlu0 %1715
      %1717 = vrot.lane.b32.xlu0 %v731, 32
      %v1718 = vpop.permute.xlu0 %1717
      %1719 = vrot.lane.b32.xlu0 %v732, 32
      %v1720 = vpop.permute.xlu0 %1719
      %1721 = vrot.lane.b32.xlu0 %v733, 32
      %v1722 = vpop.permute.xlu0 %1721
      %1723 = vrot.lane.b32.xlu0 %v734, 32
      %v1724 = vpop.permute.xlu0 %1723
      %1725 = vrot.lane.b32.xlu0 %v735, 32
      %v1726 = vpop.permute.xlu0 %1725
      %1727 = vrot.lane.b32.xlu0 %v736, 32
      %v1728 = vpop.permute.xlu0 %1727
      %v1761 = vsel %vm211, %v448, %v770
      %v1762 = vsel %vm211, %v449, %v772
      %v1763 = vsel %vm211, %v450, %v774
      %v1764 = vsel %vm211, %v451, %v776
      %v1765 = vsel %vm211, %v452, %v778
      %v1766 = vsel %vm211, %v453, %v780
      %v1767 = vsel %vm211, %v454, %v782
      %v1768 = vsel %vm211, %v455, %v784
      %v1769 = vsel %vm211, %v456, %v786
      %v1770 = vsel %vm211, %v457, %v788
      %v1771 = vsel %vm211, %v458, %v790
      %v1772 = vsel %vm211, %v459, %v792
      %v1773 = vsel %vm211, %v460, %v794
      %v1774 = vsel %vm211, %v461, %v796
      %v1775 = vsel %vm211, %v462, %v798
      %v1776 = vsel %vm211, %v463, %v800
      %v1777 = vsel %vm211, %v464, %v802
      %v1778 = vsel %vm211, %v465, %v804
      %v1779 = vsel %vm211, %v466, %v806
      %v1780 = vsel %vm211, %v467, %v808
      %v1781 = vsel %vm211, %v468, %v810
      %v1782 = vsel %vm211, %v469, %v812
      %v1783 = vsel %vm211, %v470, %v814
      %v1784 = vsel %vm211, %v471, %v816
      %v1785 = vsel %vm211, %v472, %v818
      %v1786 = vsel %vm211, %v473, %v820
      %v1787 = vsel %vm211, %v474, %v822
      %v1788 = vsel %vm211, %v475, %v824
      %v1789 = vsel %vm211, %v476, %v826
      %v1790 = vsel %vm211, %v477, %v828
      %v1791 = vsel %vm211, %v478, %v830
      %v1792 = vsel %vm211, %v479, %v832
      %vm1793 = vcmask 64512
      %v1794 = vsel %vm1793, %v1761, %v898
      %v1795 = vsel %vm1793, %v1762, %v900
      %v1796 = vsel %vm1793, %v1763, %v902
      %v1797 = vsel %vm1793, %v1764, %v904
      %v1798 = vsel %vm1793, %v1765, %v906
      %v1799 = vsel %vm1793, %v1766, %v908
      %v1800 = vsel %vm1793, %v1767, %v910
      %v1801 = vsel %vm1793, %v1768, %v912
      %v1802 = vsel %vm1793, %v1769, %v914
      %v1803 = vsel %vm1793, %v1770, %v916
      %v1804 = vsel %vm1793, %v1771, %v918
      %v1805 = vsel %vm1793, %v1772, %v920
      %v1806 = vsel %vm1793, %v1773, %v922
      %v1807 = vsel %vm1793, %v1774, %v924
      %v1808 = vsel %vm1793, %v1775, %v926
      %v1809 = vsel %vm1793, %v1776, %v928
      %v1810 = vsel %vm1793, %v1777, %v930
      %v1811 = vsel %vm1793, %v1778, %v932
      %v1812 = vsel %vm1793, %v1779, %v934
      %v1813 = vsel %vm1793, %v1780, %v936
      %v1814 = vsel %vm1793, %v1781, %v938
      %v1815 = vsel %vm1793, %v1782, %v940
      %v1816 = vsel %vm1793, %v1783, %v942
      %v1817 = vsel %vm1793, %v1784, %v944
      %v1818 = vsel %vm1793, %v1785, %v946
      %v1819 = vsel %vm1793, %v1786, %v948
      %v1820 = vsel %vm1793, %v1787, %v950
      %v1821 = vsel %vm1793, %v1788, %v952
      %v1822 = vsel %vm1793, %v1789, %v954
      %v1823 = vsel %vm1793, %v1790, %v956
      %v1824 = vsel %vm1793, %v1791, %v958
      %v1825 = vsel %vm1793, %v1792, %v960
      %vm1826 = vcmask 97280
      %v1827 = vsel %vm1826, %v1794, %v1026
      %v1828 = vsel %vm1826, %v1795, %v1028
      %v1829 = vsel %vm1826, %v1796, %v1030
      %v1830 = vsel %vm1826, %v1797, %v1032
      %v1831 = vsel %vm1826, %v1798, %v1034
      %v1832 = vsel %vm1826, %v1799, %v1036
      %v1833 = vsel %vm1826, %v1800, %v1038
      %v1834 = vsel %vm1826, %v1801, %v1040
      %v1835 = vsel %vm1826, %v1802, %v1042
      %v1836 = vsel %vm1826, %v1803, %v1044
      %v1837 = vsel %vm1826, %v1804, %v1046
      %v1838 = vsel %vm1826, %v1805, %v1048
      %v1839 = vsel %vm1826, %v1806, %v1050
      %v1840 = vsel %vm1826, %v1807, %v1052
      %v1841 = vsel %vm1826, %v1808, %v1054
      %v1842 = vsel %vm1826, %v1809, %v1056
      %v1843 = vsel %vm1826, %v1810, %v1058
      %v1844 = vsel %vm1826, %v1811, %v1060
      %v1845 = vsel %vm1826, %v1812, %v1062
      %v1846 = vsel %vm1826, %v1813, %v1064
      %v1847 = vsel %vm1826, %v1814, %v1066
      %v1848 = vsel %vm1826, %v1815, %v1068
      %v1849 = vsel %vm1826, %v1816, %v1070
      %v1850 = vsel %vm1826, %v1817, %v1072
      %v1851 = vsel %vm1826, %v1818, %v1074
      %v1852 = vsel %vm1826, %v1819, %v1076
      %v1853 = vsel %vm1826, %v1820, %v1078
      %v1854 = vsel %vm1826, %v1821, %v1080
      %v1855 = vsel %vm1826, %v1822, %v1082
      %v1856 = vsel %vm1826, %v1823, %v1084
      %v1857 = vsel %vm1826, %v1824, %v1086
      %v1858 = vsel %vm1826, %v1825, %v1088
      %vm1859 = vcmask 130048
      %v1860 = vsel %vm1859, %v1827, %v1154
      %v1861 = vsel %vm1859, %v1828, %v1156
      %v1862 = vsel %vm1859, %v1829, %v1158
      %v1863 = vsel %vm1859, %v1830, %v1160
      %v1864 = vsel %vm1859, %v1831, %v1162
      %v1865 = vsel %vm1859, %v1832, %v1164
      %v1866 = vsel %vm1859, %v1833, %v1166
      %v1867 = vsel %vm1859, %v1834, %v1168
      %v1868 = vsel %vm1859, %v1835, %v1170
      %v1869 = vsel %vm1859, %v1836, %v1172
      %v1870 = vsel %vm1859, %v1837, %v1174
      %v1871 = vsel %vm1859, %v1838, %v1176
      %v1872 = vsel %vm1859, %v1839, %v1178
      %v1873 = vsel %vm1859, %v1840, %v1180
      %v1874 = vsel %vm1859, %v1841, %v1182
      %v1875 = vsel %vm1859, %v1842, %v1184
      %v1876 = vsel %vm1859, %v1843, %v1186
      %v1877 = vsel %vm1859, %v1844, %v1188
      %v1878 = vsel %vm1859, %v1845, %v1190
      %v1879 = vsel %vm1859, %v1846, %v1192
      %v1880 = vsel %vm1859, %v1847, %v1194
      %v1881 = vsel %vm1859, %v1848, %v1196
      %v1882 = vsel %vm1859, %v1849, %v1198
      %v1883 = vsel %vm1859, %v1850, %v1200
      %v1884 = vsel %vm1859, %v1851, %v1202
      %v1885 = vsel %vm1859, %v1852, %v1204
      %v1886 = vsel %vm1859, %v1853, %v1206
      %v1887 = vsel %vm1859, %v1854, %v1208
      %v1888 = vsel %vm1859, %v1855, %v1210
      %v1889 = vsel %vm1859, %v1856, %v1212
      %v1890 = vsel %vm1859, %v1857, %v1214
      %v1891 = vsel %vm1859, %v1858, %v1216
      %vm1892 = vcmask 162816
      %v1893 = vsel %vm1892, %v1860, %v1282
      %v1894 = vsel %vm1892, %v1861, %v1284
      %v1895 = vsel %vm1892, %v1862, %v1286
      %v1896 = vsel %vm1892, %v1863, %v1288
      %v1897 = vsel %vm1892, %v1864, %v1290
      %v1898 = vsel %vm1892, %v1865, %v1292
      %v1899 = vsel %vm1892, %v1866, %v1294
      %v1900 = vsel %vm1892, %v1867, %v1296
      %v1901 = vsel %vm1892, %v1868, %v1298
      %v1902 = vsel %vm1892, %v1869, %v1300
      %v1903 = vsel %vm1892, %v1870, %v1302
      %v1904 = vsel %vm1892, %v1871, %v1304
      %v1905 = vsel %vm1892, %v1872, %v1306
      %v1906 = vsel %vm1892, %v1873, %v1308
      %v1907 = vsel %vm1892, %v1874, %v1310
      %v1908 = vsel %vm1892, %v1875, %v1312
      %v1909 = vsel %vm1892, %v1876, %v1314
      %v1910 = vsel %vm1892, %v1877, %v1316
      %v1911 = vsel %vm1892, %v1878, %v1318
      %v1912 = vsel %vm1892, %v1879, %v1320
      %v1913 = vsel %vm1892, %v1880, %v1322
      %v1914 = vsel %vm1892, %v1881, %v1324
      %v1915 = vsel %vm1892, %v1882, %v1326
      %v1916 = vsel %vm1892, %v1883, %v1328
      %v1917 = vsel %vm1892, %v1884, %v1330
      %v1918 = vsel %vm1892, %v1885, %v1332
      %v1919 = vsel %vm1892, %v1886, %v1334
      %v1920 = vsel %vm1892, %v1887, %v1336
      %v1921 = vsel %vm1892, %v1888, %v1338
      %v1922 = vsel %vm1892, %v1889, %v1340
      %v1923 = vsel %vm1892, %v1890, %v1342
      %v1924 = vsel %vm1892, %v1891, %v1344
      %vm1925 = vcmask 195584
      %v1926 = vsel %vm1925, %v1893, %v1410
      %v1927 = vsel %vm1925, %v1894, %v1412
      %v1928 = vsel %vm1925, %v1895, %v1414
      %v1929 = vsel %vm1925, %v1896, %v1416
      %v1930 = vsel %vm1925, %v1897, %v1418
      %v1931 = vsel %vm1925, %v1898, %v1420
      %v1932 = vsel %vm1925, %v1899, %v1422
      %v1933 = vsel %vm1925, %v1900, %v1424
      %v1934 = vsel %vm1925, %v1901, %v1426
      %v1935 = vsel %vm1925, %v1902, %v1428
      %v1936 = vsel %vm1925, %v1903, %v1430
      %v1937 = vsel %vm1925, %v1904, %v1432
      %v1938 = vsel %vm1925, %v1905, %v1434
      %v1939 = vsel %vm1925, %v1906, %v1436
      %v1940 = vsel %vm1925, %v1907, %v1438
      %v1941 = vsel %vm1925, %v1908, %v1440
      %v1942 = vsel %vm1925, %v1909, %v1442
      %v1943 = vsel %vm1925, %v1910, %v1444
      %v1944 = vsel %vm1925, %v1911, %v1446
      %v1945 = vsel %vm1925, %v1912, %v1448
      %v1946 = vsel %vm1925, %v1913, %v1450
      %v1947 = vsel %vm1925, %v1914, %v1452
      %v1948 = vsel %vm1925, %v1915, %v1454
      %v1949 = vsel %vm1925, %v1916, %v1456
      %v1950 = vsel %vm1925, %v1917, %v1458
      %v1951 = vsel %vm1925, %v1918, %v1460
      %v1952 = vsel %vm1925, %v1919, %v1462
      %v1953 = vsel %vm1925, %v1920, %v1464
      %v1954 = vsel %vm1925, %v1921, %v1466
      %v1955 = vsel %vm1925, %v1922, %v1468
      %v1956 = vsel %vm1925, %v1923, %v1470
      %v1957 = vsel %vm1925, %v1924, %v1472
      %vm1958 = vcmask 228352
      %v1959 = vsel %vm1958, %v1926, %v1538
      %v1960 = vsel %vm1958, %v1927, %v1540
      %v1961 = vsel %vm1958, %v1928, %v1542
      %v1962 = vsel %vm1958, %v1929, %v1544
      %v1963 = vsel %vm1958, %v1930, %v1546
      %v1964 = vsel %vm1958, %v1931, %v1548
      %v1965 = vsel %vm1958, %v1932, %v1550
      %v1966 = vsel %vm1958, %v1933, %v1552
      %v1967 = vsel %vm1958, %v1934, %v1554
      %v1968 = vsel %vm1958, %v1935, %v1556
      %v1969 = vsel %vm1958, %v1936, %v1558
      %v1970 = vsel %vm1958, %v1937, %v1560
      %v1971 = vsel %vm1958, %v1938, %v1562
      %v1972 = vsel %vm1958, %v1939, %v1564
      %v1973 = vsel %vm1958, %v1940, %v1566
      %v1974 = vsel %vm1958, %v1941, %v1568
      %v1975 = vsel %vm1958, %v1942, %v1570
      %v1976 = vsel %vm1958, %v1943, %v1572
      %v1977 = vsel %vm1958, %v1944, %v1574
      %v1978 = vsel %vm1958, %v1945, %v1576
      %v1979 = vsel %vm1958, %v1946, %v1578
      %v1980 = vsel %vm1958, %v1947, %v1580
      %v1981 = vsel %vm1958, %v1948, %v1582
      %v1982 = vsel %vm1958, %v1949, %v1584
      %v1983 = vsel %vm1958, %v1950, %v1586
      %v1984 = vsel %vm1958, %v1951, %v1588
      %v1985 = vsel %vm1958, %v1952, %v1590
      %v1986 = vsel %vm1958, %v1953, %v1592
      %v1987 = vsel %vm1958, %v1954, %v1594
      %v1988 = vsel %vm1958, %v1955, %v1596
      %v1989 = vsel %vm1958, %v1956, %v1598
      %v1990 = vsel %vm1958, %v1957, %v1600
      %vm1991 = vcmask 261120
      %v1992 = vsel %vm1991, %v1959, %v1666
      %v1993 = vsel %vm1991, %v1960, %v1668
      %v1994 = vsel %vm1991, %v1961, %v1670
      %v1995 = vsel %vm1991, %v1962, %v1672
      %v1996 = vsel %vm1991, %v1963, %v1674
      %v1997 = vsel %vm1991, %v1964, %v1676
      %v1998 = vsel %vm1991, %v1965, %v1678
      %v1999 = vsel %vm1991, %v1966, %v1680
      %v2000 = vsel %vm1991, %v1967, %v1682
      %v2001 = vsel %vm1991, %v1968, %v1684
      %v2002 = vsel %vm1991, %v1969, %v1686
      %v2003 = vsel %vm1991, %v1970, %v1688
      %v2004 = vsel %vm1991, %v1971, %v1690
      %v2005 = vsel %vm1991, %v1972, %v1692
      %v2006 = vsel %vm1991, %v1973, %v1694
      %v2007 = vsel %vm1991, %v1974, %v1696
      %v2008 = vsel %vm1991, %v1975, %v1698
      %v2009 = vsel %vm1991, %v1976, %v1700
      %v2010 = vsel %vm1991, %v1977, %v1702
      %v2011 = vsel %vm1991, %v1978, %v1704
      %v2012 = vsel %vm1991, %v1979, %v1706
      %v2013 = vsel %vm1991, %v1980, %v1708
      %v2014 = vsel %vm1991, %v1981, %v1710
      %v2015 = vsel %vm1991, %v1982, %v1712
      %v2016 = vsel %vm1991, %v1983, %v1714
      %v2017 = vsel %vm1991, %v1984, %v1716
      %v2018 = vsel %vm1991, %v1985, %v1718
      %v2019 = vsel %vm1991, %v1986, %v1720
      %v2020 = vsel %vm1991, %v1987, %v1722
      %v2021 = vsel %vm1991, %v1988, %v1724
      %v2022 = vsel %vm1991, %v1989, %v1726
      %v2023 = vsel %vm1991, %v1990, %v1728
      %v2024 = vld [vmem:[%s1] sm:$0xff]
      %v2025 = vld [vmem:[%s1 + $0x8] sm:$0xff]
      %v2026 = vld [vmem:[%s1 + $0x10] sm:$0xff]
      %v2027 = vld [vmem:[%s1 + $0x18] sm:$0xff]
      %v2028 = vld [vmem:[%s1 + $0x20] sm:$0xf]
      %vm2029 = vcmask 293888
      %v2031 = vsel %vm2029, %v1992, 0
      %v2034 = vsel %vm2029, %v1993, 0
      %v2037 = vsel %vm2029, %v1994, 0
      %v2040 = vsel %vm2029, %v1995, 0
      %v2043 = vsel %vm2029, %v1996, 0
      %v2046 = vsel %vm2029, %v1997, 0
      %v2049 = vsel %vm2029, %v1998, 0
      %v2052 = vsel %vm2029, %v1999, 0
      %v2055 = vsel %vm2029, %v2000, 0
      %v2058 = vsel %vm2029, %v2001, 0
      %v2061 = vsel %vm2029, %v2002, 0
      %v2064 = vsel %vm2029, %v2003, 0
      %v2067 = vsel %vm2029, %v2004, 0
      %v2070 = vsel %vm2029, %v2005, 0
      %v2073 = vsel %vm2029, %v2006, 0
      %v2076 = vsel %vm2029, %v2007, 0
      %v2079 = vsel %vm2029, %v2008, 0
      %v2082 = vsel %vm2029, %v2009, 0
      %v2085 = vsel %vm2029, %v2010, 0
      %v2088 = vsel %vm2029, %v2011, 0
      %v2091 = vsel %vm2029, %v2012, 0
      %v2094 = vsel %vm2029, %v2013, 0
      %v2097 = vsel %vm2029, %v2014, 0
      %v2100 = vsel %vm2029, %v2015, 0
      %v2103 = vsel %vm2029, %v2016, 0
      %v2106 = vsel %vm2029, %v2017, 0
      %v2109 = vsel %vm2029, %v2018, 0
      %v2112 = vsel %vm2029, %v2019, 0
      %v2115 = vsel %vm2029, %v2020, 0
      %v2118 = vsel %vm2029, %v2021, 0
      %v2121 = vsel %vm2029, %v2022, 0
      %v2124 = vsel %vm2029, %v2023, 0
      %vm2126 = vcmask 1043456
      %v2128 = vsel %vm2126, %v2028, 0
      %2130 = vmatpush.msra.mxu0 0.0
      %2131 = vmatpush.msra.mxu0 0.0
      %2132 = vmatpush.msra.mxu0 0.0
      %2133 = vmatpush.msra.mxu0 0.0
      %2134 = vmatpush.msra.mxu0 0.0
      %2135 = vmatpush.msra.mxu0 0.0
      %2136 = vmatpush.msra.mxu0 0.0
      %2137 = vmatpush.msra.mxu0 0.0
      %2138 = vmatpush.msra.mxu0 0.0
      %2139 = vmatpush.msra.mxu0 0.0
      %2140 = vmatpush.msra.mxu0 0.0
      %2141 = vmatpush.msra.mxu0 %v2128
      %2142 = vmatpush.msra.mxu0 %v2027
      %2143 = vmatpush.msra.mxu0 %v2026
      %2144 = vmatpush.msra.mxu0 %v2025
      %2145 = vmatpush.msra.mxu0 %v2024
      %2146 = vmatmul.f32.gmra.mxu0 %v2031
      %v2147 = vpop.f32.mrf.mxu0
      %v2148 = vadd.f32 0.0, %v2147
      %2149 = vmatmul.f32.gmra.mxu0 %v2034
      %v2150 = vpop.f32.mrf.mxu0
      %v2151 = vadd.f32 0.0, %v2150
      %2152 = vmatmul.f32.gmra.mxu0 %v2037
      %v2153 = vpop.f32.mrf.mxu0
      %v2154 = vadd.f32 0.0, %v2153
      %2155 = vmatmul.f32.gmra.mxu0 %v2040
      %v2156 = vpop.f32.mrf.mxu0
      %v2157 = vadd.f32 0.0, %v2156
      %2158 = vmatmul.f32.gmra.mxu0 %v2043
      %v2159 = vpop.f32.mrf.mxu0
      %v2160 = vadd.f32 0.0, %v2159
      %2161 = vmatmul.f32.gmra.mxu0 %v2046
      %v2162 = vpop.f32.mrf.mxu0
      %v2163 = vadd.f32 0.0, %v2162
      %2164 = vmatmul.f32.gmra.mxu0 %v2049
      %v2165 = vpop.f32.mrf.mxu0
      %v2166 = vadd.f32 0.0, %v2165
      %2167 = vmatmul.f32.gmra.mxu0 %v2052
      %v2168 = vpop.f32.mrf.mxu0
      %v2169 = vadd.f32 0.0, %v2168
      %2170 = vmatmul.f32.gmra.mxu0 %v2055
      %v2171 = vpop.f32.mrf.mxu0
      %v2172 = vadd.f32 0.0, %v2171
      %2173 = vmatmul.f32.gmra.mxu0 %v2058
      %v2174 = vpop.f32.mrf.mxu0
      %v2175 = vadd.f32 0.0, %v2174
      %2176 = vmatmul.f32.gmra.mxu0 %v2061
      %v2177 = vpop.f32.mrf.mxu0
      %v2178 = vadd.f32 0.0, %v2177
      %2179 = vmatmul.f32.gmra.mxu0 %v2064
      %v2180 = vpop.f32.mrf.mxu0
      %v2181 = vadd.f32 0.0, %v2180
      %2182 = vmatmul.f32.gmra.mxu0 %v2067
      %v2183 = vpop.f32.mrf.mxu0
      %v2184 = vadd.f32 0.0, %v2183
      %2185 = vmatmul.f32.gmra.mxu0 %v2070
      %v2186 = vpop.f32.mrf.mxu0
      %v2187 = vadd.f32 0.0, %v2186
      %2188 = vmatmul.f32.gmra.mxu0 %v2073
      %v2189 = vpop.f32.mrf.mxu0
      %v2190 = vadd.f32 0.0, %v2189
      %2191 = vmatmul.f32.gmra.mxu0 %v2076
      %v2192 = vpop.f32.mrf.mxu0
      %v2193 = vadd.f32 0.0, %v2192
      %2194 = vmatmul.f32.gmra.mxu0 %v2079
      %v2195 = vpop.f32.mrf.mxu0
      %v2196 = vadd.f32 0.0, %v2195
      %2197 = vmatmul.f32.gmra.mxu0 %v2082
      %v2198 = vpop.f32.mrf.mxu0
      %v2199 = vadd.f32 0.0, %v2198
      %2200 = vmatmul.f32.gmra.mxu0 %v2085
      %v2201 = vpop.f32.mrf.mxu0
      %v2202 = vadd.f32 0.0, %v2201
      %2203 = vmatmul.f32.gmra.mxu0 %v2088
      %v2204 = vpop.f32.mrf.mxu0
      %v2205 = vadd.f32 0.0, %v2204
      %2206 = vmatmul.f32.gmra.mxu0 %v2091
      %v2207 = vpop.f32.mrf.mxu0
      %v2208 = vadd.f32 0.0, %v2207
      %2209 = vmatmul.f32.gmra.mxu0 %v2094
      %v2210 = vpop.f32.mrf.mxu0
      %v2211 = vadd.f32 0.0, %v2210
      %2212 = vmatmul.f32.gmra.mxu0 %v2097
      %v2213 = vpop.f32.mrf.mxu0
      %v2214 = vadd.f32 0.0, %v2213
      %2215 = vmatmul.f32.gmra.mxu0 %v2100
      %v2216 = vpop.f32.mrf.mxu0
      %v2217 = vadd.f32 0.0, %v2216
      %2218 = vmatmul.f32.gmra.mxu0 %v2103
      %v2219 = vpop.f32.mrf.mxu0
      %v2220 = vadd.f32 0.0, %v2219
      %2221 = vmatmul.f32.gmra.mxu0 %v2106
      %v2222 = vpop.f32.mrf.mxu0
      %v2223 = vadd.f32 0.0, %v2222
      %2224 = vmatmul.f32.gmra.mxu0 %v2109
      %v2225 = vpop.f32.mrf.mxu0
      %v2226 = vadd.f32 0.0, %v2225
      %2227 = vmatmul.f32.gmra.mxu0 %v2112
      %v2228 = vpop.f32.mrf.mxu0
      %v2229 = vadd.f32 0.0, %v2228
      %2230 = vmatmul.f32.gmra.mxu0 %v2115
      %v2231 = vpop.f32.mrf.mxu0
      %v2232 = vadd.f32 0.0, %v2231
      %2233 = vmatmul.f32.gmra.mxu0 %v2118
      %v2234 = vpop.f32.mrf.mxu0
      %v2235 = vadd.f32 0.0, %v2234
      %2236 = vmatmul.f32.gmra.mxu0 %v2121
      %v2237 = vpop.f32.mrf.mxu0
      %v2238 = vadd.f32 0.0, %v2237
      %2239 = vmatmul.f32.gmra.mxu0 %v2124
      %v2240 = vpop.f32.mrf.mxu0
      %v2241 = vadd.f32 0.0, %v2240
      %2242 = vdwg.mxu0
      %vm2243 = vcmask 15360
      %2244 = vst.msk [vmem:[%s205] sm:$0xff] %vm2243, %v2148
      %2245 = vst.msk [vmem:[%s205 + $0x8] sm:$0xff] %vm2243, %v2151
      %2246 = vst.msk [vmem:[%s205 + $0x10] sm:$0xff] %vm2243, %v2154
      %2247 = vst.msk [vmem:[%s205 + $0x18] sm:$0xff] %vm2243, %v2157
      %2248 = vst.msk [vmem:[%s205 + $0x20] sm:$0xff] %vm2243, %v2160
      %2249 = vst.msk [vmem:[%s205 + $0x28] sm:$0xff] %vm2243, %v2163
      %2250 = vst.msk [vmem:[%s205 + $0x30] sm:$0xff] %vm2243, %v2166
      %2251 = vst.msk [vmem:[%s205 + $0x38] sm:$0xff] %vm2243, %v2169
      %2252 = vst.msk [vmem:[%s205 + $0x40] sm:$0xff] %vm2243, %v2172
      %2253 = vst.msk [vmem:[%s205 + $0x48] sm:$0xff] %vm2243, %v2175
      %2254 = vst.msk [vmem:[%s205 + $0x50] sm:$0xff] %vm2243, %v2178
      %2255 = vst.msk [vmem:[%s205 + $0x58] sm:$0xff] %vm2243, %v2181
      %2256 = vst.msk [vmem:[%s205 + $0x60] sm:$0xff] %vm2243, %v2184
      %2257 = vst.msk [vmem:[%s205 + $0x68] sm:$0xff] %vm2243, %v2187
      %2258 = vst.msk [vmem:[%s205 + $0x70] sm:$0xff] %vm2243, %v2190
      %2259 = vst.msk [vmem:[%s205 + $0x78] sm:$0xff] %vm2243, %v2193
      %2260 = vst.msk [vmem:[%s205 + $0x80] sm:$0xff] %vm2243, %v2196
      %2261 = vst.msk [vmem:[%s205 + $0x88] sm:$0xff] %vm2243, %v2199
      %2262 = vst.msk [vmem:[%s205 + $0x90] sm:$0xff] %vm2243, %v2202
      %2263 = vst.msk [vmem:[%s205 + $0x98] sm:$0xff] %vm2243, %v2205
      %2264 = vst.msk [vmem:[%s205 + $0xa0] sm:$0xff] %vm2243, %v2208
      %2265 = vst.msk [vmem:[%s205 + $0xa8] sm:$0xff] %vm2243, %v2211
      %2266 = vst.msk [vmem:[%s205 + $0xb0] sm:$0xff] %vm2243, %v2214
      %2267 = vst.msk [vmem:[%s205 + $0xb8] sm:$0xff] %vm2243, %v2217
      %2268 = vst.msk [vmem:[%s205 + $0xc0] sm:$0xff] %vm2243, %v2220
      %2269 = vst.msk [vmem:[%s205 + $0xc8] sm:$0xff] %vm2243, %v2223
      %2270 = vst.msk [vmem:[%s205 + $0xd0] sm:$0xff] %vm2243, %v2226
      %2271 = vst.msk [vmem:[%s205 + $0xd8] sm:$0xff] %vm2243, %v2229
      %2272 = vst.msk [vmem:[%s205 + $0xe0] sm:$0xff] %vm2243, %v2232
      %2273 = vst.msk [vmem:[%s205 + $0xe8] sm:$0xff] %vm2243, %v2235
      %2274 = vst.msk [vmem:[%s205 + $0xf0] sm:$0xff] %vm2243, %v2238
      %2275 = vst.msk [vmem:[%s205 + $0xf8] sm:$0xff] %vm2243, %v2241
      %v2276 = vld [vmem:[#allocation3] sm:$0xff]
      %v2277 = vld [vmem:[#allocation3 + $0x10] sm:$0xff]
      %v2278 = vld [vmem:[#allocation3 + $0x20] sm:$0xff]
      %v2279 = vld [vmem:[#allocation3 + $0x30] sm:$0xff]
      %v2280 = vld [vmem:[#allocation3 + $0x40] sm:$0xff]
      %v2281 = vld [vmem:[#allocation3 + $0x50] sm:$0xff]
      %v2282 = vld [vmem:[#allocation3 + $0x60] sm:$0xff]
      %v2283 = vld [vmem:[#allocation3 + $0x70] sm:$0xff]
      %v2284 = vld [vmem:[#allocation3 + $0x1] sm:$0xff]
      %v2285 = vld [vmem:[#allocation3 + $0x11] sm:$0xff]
      %v2286 = vld [vmem:[#allocation3 + $0x21] sm:$0xff]
      %v2287 = vld [vmem:[#allocation3 + $0x31] sm:$0xff]
      %v2288 = vld [vmem:[#allocation3 + $0x41] sm:$0xff]
      %v2289 = vld [vmem:[#allocation3 + $0x51] sm:$0xff]
      %v2290 = vld [vmem:[#allocation3 + $0x61] sm:$0xff]
      %v2291 = vld [vmem:[#allocation3 + $0x71] sm:$0xff]
      %v2292 = vld [vmem:[#allocation3 + $0x2] sm:$0xff]
      %v2293 = vld [vmem:[#allocation3 + $0x12] sm:$0xff]
      %v2294 = vld [vmem:[#allocation3 + $0x22] sm:$0xff]
      %v2295 = vld [vmem:[#allocation3 + $0x32] sm:$0xff]
      %v2296 = vld [vmem:[#allocation3 + $0x42] sm:$0xff]
      %v2297 = vld [vmem:[#allocation3 + $0x52] sm:$0xff]
      %v2298 = vld [vmem:[#allocation3 + $0x62] sm:$0xff]
      %v2299 = vld [vmem:[#allocation3 + $0x72] sm:$0xff]
      %v2300 = vld [vmem:[%s439] sm:$0xff]
      %v2301 = vld [vmem:[%s439 + $0x10] sm:$0xff]
      %v2302 = vld [vmem:[%s439 + $0x20] sm:$0xff]
      %v2303 = vld [vmem:[%s439 + $0x30] sm:$0xff]
      %v2304 = vld [vmem:[%s439 + $0x40] sm:$0xff]
      %v2305 = vld [vmem:[%s439 + $0x50] sm:$0xff]
      %v2306 = vld [vmem:[%s439 + $0x60] sm:$0xff]
      %v2307 = vld [vmem:[%s439 + $0x70] sm:$0xff]
      %v2308 = vld [vmem:[%s439 + $0x1] sm:$0xff]
      %v2309 = vld [vmem:[%s439 + $0x11] sm:$0xff]
      %v2310 = vld [vmem:[%s439 + $0x21] sm:$0xff]
      %v2311 = vld [vmem:[%s439 + $0x31] sm:$0xff]
      %v2312 = vld [vmem:[%s439 + $0x41] sm:$0xff]
      %v2313 = vld [vmem:[%s439 + $0x51] sm:$0xff]
      %v2314 = vld [vmem:[%s439 + $0x61] sm:$0xff]
      %v2315 = vld [vmem:[%s439 + $0x71] sm:$0xff]
      %v2316 = vld [vmem:[%s439 + $0x2] sm:$0xff]
      %v2317 = vld [vmem:[%s439 + $0x12] sm:$0xff]
      %v2318 = vld [vmem:[%s439 + $0x22] sm:$0xff]
      %v2319 = vld [vmem:[%s439 + $0x32] sm:$0xff]
      %v2320 = vld [vmem:[%s439 + $0x42] sm:$0xff]
      %v2321 = vld [vmem:[%s439 + $0x52] sm:$0xff]
      %v2322 = vld [vmem:[%s439 + $0x62] sm:$0xff]
      %v2323 = vld [vmem:[%s439 + $0x72] sm:$0xff]
      %s2324 = scalar_lea.vmem [#allocation3], 32
      %v2325 = vld [vmem:[%s2324] sm:$0xff]
      %v2326 = vld [vmem:[%s2324 + $0x10] sm:$0xff]
      %v2327 = vld [vmem:[%s2324 + $0x20] sm:$0xff]
      %v2328 = vld [vmem:[%s2324 + $0x30] sm:$0xff]
      %v2329 = vld [vmem:[%s2324 + $0x40] sm:$0xff]
      %v2330 = vld [vmem:[%s2324 + $0x50] sm:$0xff]
      %v2331 = vld [vmem:[%s2324 + $0x60] sm:$0xff]
      %v2332 = vld [vmem:[%s2324 + $0x70] sm:$0xff]
      %v2333 = vld [vmem:[%s2324 + $0x1] sm:$0xff]
      %v2334 = vld [vmem:[%s2324 + $0x11] sm:$0xff]
      %v2335 = vld [vmem:[%s2324 + $0x21] sm:$0xff]
      %v2336 = vld [vmem:[%s2324 + $0x31] sm:$0xff]
      %v2337 = vld [vmem:[%s2324 + $0x41] sm:$0xff]
      %v2338 = vld [vmem:[%s2324 + $0x51] sm:$0xff]
      %v2339 = vld [vmem:[%s2324 + $0x61] sm:$0xff]
      %v2340 = vld [vmem:[%s2324 + $0x71] sm:$0xff]
      %v2341 = vld [vmem:[%s2324 + $0x2] sm:$0xff]
      %v2342 = vld [vmem:[%s2324 + $0x12] sm:$0xff]
      %v2343 = vld [vmem:[%s2324 + $0x22] sm:$0xff]
      %v2344 = vld [vmem:[%s2324 + $0x32] sm:$0xff]
      %v2345 = vld [vmem:[%s2324 + $0x42] sm:$0xff]
      %v2346 = vld [vmem:[%s2324 + $0x52] sm:$0xff]
      %v2347 = vld [vmem:[%s2324 + $0x62] sm:$0xff]
      %v2348 = vld [vmem:[%s2324 + $0x72] sm:$0xff]
      %2357 = vrot.lane.b32.xlu0 %v2284, 4
      %v2358 = vpop.permute.xlu0 %2357
      %2359 = vrot.lane.b32.xlu0 %v2285, 4
      %v2360 = vpop.permute.xlu0 %2359
      %2361 = vrot.lane.b32.xlu0 %v2286, 4
      %v2362 = vpop.permute.xlu0 %2361
      %2363 = vrot.lane.b32.xlu0 %v2287, 4
      %v2364 = vpop.permute.xlu0 %2363
      %2365 = vrot.lane.b32.xlu0 %v2288, 4
      %v2366 = vpop.permute.xlu0 %2365
      %2367 = vrot.lane.b32.xlu0 %v2289, 4
      %v2368 = vpop.permute.xlu0 %2367
      %2369 = vrot.lane.b32.xlu0 %v2290, 4
      %v2370 = vpop.permute.xlu0 %2369
      %2371 = vrot.lane.b32.xlu0 %v2291, 4
      %v2372 = vpop.permute.xlu0 %2371
      %2389 = vrot.lane.b32.xlu0 %v2292, 8
      %v2390 = vpop.permute.xlu0 %2389
      %2391 = vrot.lane.b32.xlu0 %v2293, 8
      %v2392 = vpop.permute.xlu0 %2391
      %2393 = vrot.lane.b32.xlu0 %v2294, 8
      %v2394 = vpop.permute.xlu0 %2393
      %2395 = vrot.lane.b32.xlu0 %v2295, 8
      %v2396 = vpop.permute.xlu0 %2395
      %2397 = vrot.lane.b32.xlu0 %v2296, 8
      %v2398 = vpop.permute.xlu0 %2397
      %2399 = vrot.lane.b32.xlu0 %v2297, 8
      %v2400 = vpop.permute.xlu0 %2399
      %2401 = vrot.lane.b32.xlu0 %v2298, 8
      %v2402 = vpop.permute.xlu0 %2401
      %2403 = vrot.lane.b32.xlu0 %v2299, 8
      %v2404 = vpop.permute.xlu0 %2403
      %2421 = vrot.lane.b32.xlu0 %v2300, 12
      %v2422 = vpop.permute.xlu0 %2421
      %2423 = vrot.lane.b32.xlu0 %v2301, 12
      %v2424 = vpop.permute.xlu0 %2423
      %2425 = vrot.lane.b32.xlu0 %v2302, 12
      %v2426 = vpop.permute.xlu0 %2425
      %2427 = vrot.lane.b32.xlu0 %v2303, 12
      %v2428 = vpop.permute.xlu0 %2427
      %2429 = vrot.lane.b32.xlu0 %v2304, 12
      %v2430 = vpop.permute.xlu0 %2429
      %2431 = vrot.lane.b32.xlu0 %v2305, 12
      %v2432 = vpop.permute.xlu0 %2431
      %2433 = vrot.lane.b32.xlu0 %v2306, 12
      %v2434 = vpop.permute.xlu0 %2433
      %2435 = vrot.lane.b32.xlu0 %v2307, 12
      %v2436 = vpop.permute.xlu0 %2435
      %2453 = vrot.lane.b32.xlu0 %v2308, 16
      %v2454 = vpop.permute.xlu0 %2453
      %2455 = vrot.lane.b32.xlu0 %v2309, 16
      %v2456 = vpop.permute.xlu0 %2455
      %2457 = vrot.lane.b32.xlu0 %v2310, 16
      %v2458 = vpop.permute.xlu0 %2457
      %2459 = vrot.lane.b32.xlu0 %v2311, 16
      %v2460 = vpop.permute.xlu0 %2459
      %2461 = vrot.lane.b32.xlu0 %v2312, 16
      %v2462 = vpop.permute.xlu0 %2461
      %2463 = vrot.lane.b32.xlu0 %v2313, 16
      %v2464 = vpop.permute.xlu0 %2463
      %2465 = vrot.lane.b32.xlu0 %v2314, 16
      %v2466 = vpop.permute.xlu0 %2465
      %2467 = vrot.lane.b32.xlu0 %v2315, 16
      %v2468 = vpop.permute.xlu0 %2467
      %2485 = vrot.lane.b32.xlu0 %v2316, 20
      %v2486 = vpop.permute.xlu0 %2485
      %2487 = vrot.lane.b32.xlu0 %v2317, 20
      %v2488 = vpop.permute.xlu0 %2487
      %2489 = vrot.lane.b32.xlu0 %v2318, 20
      %v2490 = vpop.permute.xlu0 %2489
      %2491 = vrot.lane.b32.xlu0 %v2319, 20
      %v2492 = vpop.permute.xlu0 %2491
      %2493 = vrot.lane.b32.xlu0 %v2320, 20
      %v2494 = vpop.permute.xlu0 %2493
      %2495 = vrot.lane.b32.xlu0 %v2321, 20
      %v2496 = vpop.permute.xlu0 %2495
      %2497 = vrot.lane.b32.xlu0 %v2322, 20
      %v2498 = vpop.permute.xlu0 %2497
      %2499 = vrot.lane.b32.xlu0 %v2323, 20
      %v2500 = vpop.permute.xlu0 %2499
      %2517 = vrot.lane.b32.xlu0 %v2325, 24
      %v2518 = vpop.permute.xlu0 %2517
      %2519 = vrot.lane.b32.xlu0 %v2326, 24
      %v2520 = vpop.permute.xlu0 %2519
      %2521 = vrot.lane.b32.xlu0 %v2327, 24
      %v2522 = vpop.permute.xlu0 %2521
      %2523 = vrot.lane.b32.xlu0 %v2328, 24
      %v2524 = vpop.permute.xlu0 %2523
      %2525 = vrot.lane.b32.xlu0 %v2329, 24
      %v2526 = vpop.permute.xlu0 %2525
      %2527 = vrot.lane.b32.xlu0 %v2330, 24
      %v2528 = vpop.permute.xlu0 %2527
      %2529 = vrot.lane.b32.xlu0 %v2331, 24
      %v2530 = vpop.permute.xlu0 %2529
      %2531 = vrot.lane.b32.xlu0 %v2332, 24
      %v2532 = vpop.permute.xlu0 %2531
      %2549 = vrot.lane.b32.xlu0 %v2333, 28
      %v2550 = vpop.permute.xlu0 %2549
      %2551 = vrot.lane.b32.xlu0 %v2334, 28
      %v2552 = vpop.permute.xlu0 %2551
      %2553 = vrot.lane.b32.xlu0 %v2335, 28
      %v2554 = vpop.permute.xlu0 %2553
      %2555 = vrot.lane.b32.xlu0 %v2336, 28
      %v2556 = vpop.permute.xlu0 %2555
      %2557 = vrot.lane.b32.xlu0 %v2337, 28
      %v2558 = vpop.permute.xlu0 %2557
      %2559 = vrot.lane.b32.xlu0 %v2338, 28
      %v2560 = vpop.permute.xlu0 %2559
      %2561 = vrot.lane.b32.xlu0 %v2339, 28
      %v2562 = vpop.permute.xlu0 %2561
      %2563 = vrot.lane.b32.xlu0 %v2340, 28
      %v2564 = vpop.permute.xlu0 %2563
      %2581 = vrot.lane.b32.xlu0 %v2341, 32
      %v2582 = vpop.permute.xlu0 %2581
      %2583 = vrot.lane.b32.xlu0 %v2342, 32
      %v2584 = vpop.permute.xlu0 %2583
      %2585 = vrot.lane.b32.xlu0 %v2343, 32
      %v2586 = vpop.permute.xlu0 %2585
      %2587 = vrot.lane.b32.xlu0 %v2344, 32
      %v2588 = vpop.permute.xlu0 %2587
      %2589 = vrot.lane.b32.xlu0 %v2345, 32
      %v2590 = vpop.permute.xlu0 %2589
      %2591 = vrot.lane.b32.xlu0 %v2346, 32
      %v2592 = vpop.permute.xlu0 %2591
      %2593 = vrot.lane.b32.xlu0 %v2347, 32
      %v2594 = vpop.permute.xlu0 %2593
      %2595 = vrot.lane.b32.xlu0 %v2348, 32
      %v2596 = vpop.permute.xlu0 %2595
      %v2605 = vsel %vm211, %v2276, %v2358
      %v2606 = vsel %vm211, %v2277, %v2360
      %v2607 = vsel %vm211, %v2278, %v2362
      %v2608 = vsel %vm211, %v2279, %v2364
      %v2609 = vsel %vm211, %v2280, %v2366
      %v2610 = vsel %vm211, %v2281, %v2368
      %v2611 = vsel %vm211, %v2282, %v2370
      %v2612 = vsel %vm211, %v2283, %v2372
      %v2613 = vsel %vm1793, %v2605, %v2390
      %v2614 = vsel %vm1793, %v2606, %v2392
      %v2615 = vsel %vm1793, %v2607, %v2394
      %v2616 = vsel %vm1793, %v2608, %v2396
      %v2617 = vsel %vm1793, %v2609, %v2398
      %v2618 = vsel %vm1793, %v2610, %v2400
      %v2619 = vsel %vm1793, %v2611, %v2402
      %v2620 = vsel %vm1793, %v2612, %v2404
      %v2621 = vsel %vm1826, %v2613, %v2422
      %v2622 = vsel %vm1826, %v2614, %v2424
      %v2623 = vsel %vm1826, %v2615, %v2426
      %v2624 = vsel %vm1826, %v2616, %v2428
      %v2625 = vsel %vm1826, %v2617, %v2430
      %v2626 = vsel %vm1826, %v2618, %v2432
      %v2627 = vsel %vm1826, %v2619, %v2434
      %v2628 = vsel %vm1826, %v2620, %v2436
      %v2629 = vsel %vm1859, %v2621, %v2454
      %v2630 = vsel %vm1859, %v2622, %v2456
      %v2631 = vsel %vm1859, %v2623, %v2458
      %v2632 = vsel %vm1859, %v2624, %v2460
      %v2633 = vsel %vm1859, %v2625, %v2462
      %v2634 = vsel %vm1859, %v2626, %v2464
      %v2635 = vsel %vm1859, %v2627, %v2466
      %v2636 = vsel %vm1859, %v2628, %v2468
      %v2637 = vsel %vm1892, %v2629, %v2486
      %v2638 = vsel %vm1892, %v2630, %v2488
      %v2639 = vsel %vm1892, %v2631, %v2490
      %v2640 = vsel %vm1892, %v2632, %v2492
      %v2641 = vsel %vm1892, %v2633, %v2494
      %v2642 = vsel %vm1892, %v2634, %v2496
      %v2643 = vsel %vm1892, %v2635, %v2498
      %v2644 = vsel %vm1892, %v2636, %v2500
      %v2645 = vsel %vm1925, %v2637, %v2518
      %v2646 = vsel %vm1925, %v2638, %v2520
      %v2647 = vsel %vm1925, %v2639, %v2522
      %v2648 = vsel %vm1925, %v2640, %v2524
      %v2649 = vsel %vm1925, %v2641, %v2526
      %v2650 = vsel %vm1925, %v2642, %v2528
      %v2651 = vsel %vm1925, %v2643, %v2530
      %v2652 = vsel %vm1925, %v2644, %v2532
      %v2653 = vsel %vm1958, %v2645, %v2550
      %v2654 = vsel %vm1958, %v2646, %v2552
      %v2655 = vsel %vm1958, %v2647, %v2554
      %v2656 = vsel %vm1958, %v2648, %v2556
      %v2657 = vsel %vm1958, %v2649, %v2558
      %v2658 = vsel %vm1958, %v2650, %v2560
      %v2659 = vsel %vm1958, %v2651, %v2562
      %v2660 = vsel %vm1958, %v2652, %v2564
      %v2661 = vsel %vm1991, %v2653, %v2582
      %v2662 = vsel %vm1991, %v2654, %v2584
      %v2663 = vsel %vm1991, %v2655, %v2586
      %v2664 = vsel %vm1991, %v2656, %v2588
      %v2665 = vsel %vm1991, %v2657, %v2590
      %v2666 = vsel %vm1991, %v2658, %v2592
      %v2667 = vsel %vm1991, %v2659, %v2594
      %v2668 = vsel %vm1991, %v2660, %v2596
      %v2669 = vld [vmem:[%s2] sm:$0xff]
      %v2670 = vld [vmem:[%s2 + $0x8] sm:$0xff]
      %v2671 = vld [vmem:[%s2 + $0x10] sm:$0xff]
      %v2672 = vld [vmem:[%s2 + $0x18] sm:$0xff]
      %v2673 = vld [vmem:[%s2 + $0x20] sm:$0xf]
      %v2675 = vsel %vm2029, %v2661, 0
      %v2678 = vsel %vm2029, %v2662, 0
      %v2681 = vsel %vm2029, %v2663, 0
      %v2684 = vsel %vm2029, %v2664, 0
      %v2687 = vsel %vm2029, %v2665, 0
      %v2690 = vsel %vm2029, %v2666, 0
      %v2693 = vsel %vm2029, %v2667, 0
      %v2696 = vsel %vm2029, %v2668, 0
      %v2699 = vsel %vm2126, %v2673, 0
      %2701 = vmatpush.msra.mxu0 0.0
      %2702 = vmatpush.msra.mxu0 0.0
      %2703 = vmatpush.msra.mxu0 0.0
      %2704 = vmatpush.msra.mxu0 0.0
      %2705 = vmatpush.msra.mxu0 0.0
      %2706 = vmatpush.msra.mxu0 0.0
      %2707 = vmatpush.msra.mxu0 0.0
      %2708 = vmatpush.msra.mxu0 0.0
      %2709 = vmatpush.msra.mxu0 0.0
      %2710 = vmatpush.msra.mxu0 0.0
      %2711 = vmatpush.msra.mxu0 0.0
      %2712 = vmatpush.msra.mxu0 %v2699
      %2713 = vmatpush.msra.mxu0 %v2672
      %2714 = vmatpush.msra.mxu0 %v2671
      %2715 = vmatpush.msra.mxu0 %v2670
      %2716 = vmatpush.msra.mxu0 %v2669
      %2717 = vmatmul.f32.gmra.mxu0 %v2675
      %v2718 = vpop.f32.mrf.mxu0
      %v2719 = vadd.f32 0.0, %v2718
      %2720 = vmatmul.f32.gmra.mxu0 %v2678
      %v2721 = vpop.f32.mrf.mxu0
      %v2722 = vadd.f32 0.0, %v2721
      %2723 = vmatmul.f32.gmra.mxu0 %v2681
      %v2724 = vpop.f32.mrf.mxu0
      %v2725 = vadd.f32 0.0, %v2724
      %2726 = vmatmul.f32.gmra.mxu0 %v2684
      %v2727 = vpop.f32.mrf.mxu0
      %v2728 = vadd.f32 0.0, %v2727
      %2729 = vmatmul.f32.gmra.mxu0 %v2687
      %v2730 = vpop.f32.mrf.mxu0
      %v2731 = vadd.f32 0.0, %v2730
      %2732 = vmatmul.f32.gmra.mxu0 %v2690
      %v2733 = vpop.f32.mrf.mxu0
      %v2734 = vadd.f32 0.0, %v2733
      %2735 = vmatmul.f32.gmra.mxu0 %v2693
      %v2736 = vpop.f32.mrf.mxu0
      %v2737 = vadd.f32 0.0, %v2736
      %2738 = vmatmul.f32.gmra.mxu0 %v2696
      %v2739 = vpop.f32.mrf.mxu0
      %v2740 = vadd.f32 0.0, %v2739
      %2741 = vdwg.mxu0
      %2742 = vst.msk [vmem:[%s210] sm:$0xff] %vm2243, %v2719
      %2743 = vst.msk [vmem:[%s210 + $0x8] sm:$0xff] %vm2243, %v2722
      %2744 = vst.msk [vmem:[%s210 + $0x10] sm:$0xff] %vm2243, %v2725
      %2745 = vst.msk [vmem:[%s210 + $0x18] sm:$0xff] %vm2243, %v2728
      %2746 = vst.msk [vmem:[%s210 + $0x20] sm:$0xff] %vm2243, %v2731
      %2747 = vst.msk [vmem:[%s210 + $0x28] sm:$0xff] %vm2243, %v2734
      %2748 = vst.msk [vmem:[%s210 + $0x30] sm:$0xff] %vm2243, %v2737
      %2749 = vst.msk [vmem:[%s210 + $0x38] sm:$0xff] %vm2243, %v2740
      %p2750 = scmp.lt.s32.totalorder %s16, 1
      %s2751 = scalar_select %p2750, %s16, 1
      %s2752 = smul.addr %s2751, 32
      %s2753 = smul.addr %s2752, 8
      %s2754 = scalar_lea.vmem %s3, %s2753
      %p2755 = scmp.lt.s32.totalorder %s16, 1
      %s2756 = scalar_select %p2755, %s16, 1
      %s2757 = smul.addr %s2756, 8
      %s2758 = smul.addr %s2757, 8
      %s2759 = scalar_lea.vmem %s4, %s2758
      // Predicated region
      $region33: #{tpu_custom_call.1} parent=31 // pred_check
        %p2760 = pneg %p102
      $region34: #{tpu_custom_call.1} parent=31 // pred_check_branch
        %2762 = sbr.rel (%p2760) target = $region36
      $region35: #{tpu_custom_call.1} parent=31 // pred_region
        _
      $region36: #{tpu_custom_call.1} parent=31 // pred_fallthru
        _
      // Predicated region
      $region37: #{tpu_custom_call.1} parent=31 // pred_check
        %p2763 = pneg %p128
      $region38: #{tpu_custom_call.1} parent=31 // pred_check_branch
        %2765 = sbr.rel (%p2763) target = $region40
      $region39: #{tpu_custom_call.1} parent=31 // pred_region
        _
      $region40: #{tpu_custom_call.1} parent=31 // pred_fallthru
        _
    $region32: #{tpu_custom_call.1} parent=5 // pred_fallthru
      _
    %p2766 = scmp.le.s32.totalorder 2, %s11
    // Predicated region
    $region41: #{tpu_custom_call.1} parent=5 // pred_check
      %p2767 = pneg %p2766
    $region42: #{tpu_custom_call.1} parent=5 // pred_check_branch
      %2769 = sbr.rel (%p2767) target = $region44
    $region43: #{tpu_custom_call.1} parent=5 // pred_region
      %s2770 = ssub.s32 %s11, 2
      // Predicated region
      $region45: #{tpu_custom_call.1} parent=43 // pred_check
        %p2771 = pneg %p108
      $region46: #{tpu_custom_call.1} parent=43 // pred_check_branch
        %2773 = sbr.rel (%p2771) target = $region48
      $region47: #{tpu_custom_call.1} parent=43 // pred_region
        %p2774 = scmp.lt.s32.totalorder %s17, 1
        %s2775 = scalar_select %p2774, %s17, 1
        %s2776 = smul.addr %s2775, 32
        %s2777 = smul.addr %s2776, 8
        %s2778 = scalar_lea.vmem %s3, %s2777
      $region48: #{tpu_custom_call.1} parent=43 // pred_fallthru
        _
      // Predicated region
      $region49: #{tpu_custom_call.1} parent=43 // pred_check
        %p2779 = pneg %p134
      $region50: #{tpu_custom_call.1} parent=43 // pred_check_branch
        %2781 = sbr.rel (%p2779) target = $region52
      $region51: #{tpu_custom_call.1} parent=43 // pred_region
        %p2782 = scmp.lt.s32.totalorder %s17, 1
        %s2783 = scalar_select %p2782, %s17, 1
        %s2784 = smul.addr %s2783, 8
        %s2785 = smul.addr %s2784, 8
        %s2786 = scalar_lea.vmem %s4, %s2785
      $region52: #{tpu_custom_call.1} parent=43 // pred_fallthru
        _
    $region44: #{tpu_custom_call.1} parent=5 // pred_fallthru
      _
  $region6: #{tpu_custom_call.1} parent=0 // loop_footer
    %s15 = sadd.s32 1, %s11
  $region7: #{tpu_custom_call.1} parent=0 // loop_footer_branch
    %10 = sbr.rel target = $region3
  $region8: #{tpu_custom_call.1} parent=0 // loop_exit
    _

</llo_original>
